<compile_context>
chip_gen: v5e
topology: v5e:2x2
jax: 0.10.0
libtpu: 0.0.40
codegen_flags: <defaults>
</compile_context>

<pallas_src>
import functools

import jax
import jax.numpy as jnp
from jax.experimental import pallas as pl
from jax.experimental.pallas import tpu as pltpu


# ---------------- Pallas kernels ----------------

def _conv_bn_stats_kernel(x0_ref, x1_ref, x2_ref, w_ref,
                          out_ref, sum_ref, sq_ref, *, H, W, Cin, Cp):
    """One (n, d) output slab.

    x{kd}_ref : (Hp, Wp, Cin)  bf16 -- padded input slice at padded depth d+kd
    w_ref     : (27, Cin, Cp)  bf16 -- conv weights, tap-major, Cout padded to Cp
    out_ref   : (H*W, Cp)      f32  -- conv output slab for this (n, d)
    sum_ref   : (1, Cp)        f32  -- per-channel running sum   (resident)
    sq_ref    : (1, Cp)        f32  -- per-channel running sum^2 (resident)
    """
    step = pl.program_id(0) * pl.num_programs(1) + pl.program_id(1)

    @pl.when(step == 0)
    def _init():
        sum_ref[...] = jnp.zeros_like(sum_ref)
        sq_ref[...] = jnp.zeros_like(sq_ref)

    acc = jnp.zeros((H * W, Cp), jnp.float32)
    for kd, x_ref in enumerate((x0_ref, x1_ref, x2_ref)):
        # Load once per kd; unpack bf16 -> f32 so the shifted slices + reshape
        # below work on the simple unpacked layout (the HBM stream stays bf16).
        xs = x_ref[...].astype(jnp.float32)                      # (Hp, Wp, Cin)
        for kh in range(3):
            for kw in range(3):
                # (H, W, Cin) shifted patch -> (H*W, Cin) matmul rows.
                # W is a multiple of 8 here, so the reshape is a free tile merge.
                a = xs[kh:kh + H, kw:kw + W, :].reshape(H * W, Cin)
                acc += jnp.dot(a.astype(jnp.bfloat16),
                               w_ref[kd * 9 + kh * 3 + kw],
                               preferred_element_type=jnp.float32)

    out_ref[...] = acc
    # Fused BN statistics: XLU column reductions are cheap filler under the
    # MXU-bound conv, and save a full HBM re-read of conv_out.
    sum_ref[...] += jnp.sum(acc, axis=0, keepdims=True)
    sq_ref[...] += jnp.sum(acc * acc, axis=0, keepdims=True)


def _bn_relu_kernel(x_ref, scale_ref, shift_ref, o_ref):
    # Fused affine BN + ReLU (f32 elementwise; output aliases the input buffer).
    o_ref[...] = jnp.maximum(x_ref[...] * scale_ref[...] + shift_ref[...], 0.0)


# ---------------- wrapper ----------------

@jax.jit
def conv_bn_relu_3d(x, weight, gamma, beta, eps=1e-5):
    """x: (N, Cin, D, H, W) f32; weight: (Cout, Cin, 3, 3, 3) f32 (PyTorch layout)."""
    N, Cin, D, H, W = x.shape
    Cout = weight.shape[0]
    assert weight.shape == (Cout, Cin, 3, 3, 3)

    Dp, Hp, Wp = D + 2, H + 2, W + 2
    HW = H * W
    Cp = ((Cout + 127) // 128) * 128        # lane-dense (>=128, multiple of 128)
    M = N * D * H * W                       # real elements per channel for BN

    # ---- glue (cheap, ~1.2x input): channels-last + halo pad, bf16 MXU stream ----
    xt = jnp.transpose(x, (0, 2, 3, 4, 1))                                # (N,D,H,W,Cin)
    xp = jnp.pad(xt, ((0, 0), (1, 1), (1, 1), (1, 1), (0, 0))).astype(jnp.bfloat16)

    # weight (Cout,Cin,kd,kh,kw) -> (kd,kh,kw,Cin,Cout) -> (27,Cin,Cp), bf16
    wt = jnp.transpose(weight, (2, 3, 4, 1, 0)).reshape(27, Cin, Cout)
    wt = jnp.pad(wt, ((0, 0), (0, 0), (0, Cp - Cout))).astype(jnp.bfloat16)

    def x_spec(kd):
        # Same xp array, viewed at padded-depth block d+kd (block size 1 along Dp).
        return pl.BlockSpec((None, None, Hp, Wp, Cin),
                            lambda n, d, kd=kd: (n, d + kd, 0, 0, 0))

    kernel = functools.partial(_conv_bn_stats_kernel, H=H, W=W, Cin=Cin, Cp=Cp)

    # Explicit VMEM budget: comfortably above what these blocks need, and within
    # v7x's 64 MiB physical VMEM (v5e/v6e have 128 MiB).
    vmem_limit = 48 * 1024 * 1024

    # ---- kernel 1: direct 3x3x3 conv (27 accumulated matmuls) + fused BN stats ----
    conv_out, sums, sqs = pl.pallas_call(
        kernel,
        out_shape=(
            jax.ShapeDtypeStruct((N, D, HW, Cp), jnp.float32),
            jax.ShapeDtypeStruct((1, Cp), jnp.float32),
            jax.ShapeDtypeStruct((1, Cp), jnp.float32),
        ),
        grid=(N, D),
        in_specs=[
            x_spec(0), x_spec(1), x_spec(2),
            pl.BlockSpec((27, Cin, Cp), lambda n, d: (0, 0, 0)),
        ],
        out_specs=(
            pl.BlockSpec((None, None, HW, Cp), lambda n, d: (n, d, 0, 0)),
            pl.BlockSpec((1, Cp), lambda n, d: (0, 0)),   # resident accumulator
            pl.BlockSpec((1, Cp), lambda n, d: (0, 0)),   # resident accumulator
        ),
        compiler_params=pltpu.CompilerParams(
            # stats accumulate across the whole grid -> axes must be "arbitrary"
            dimension_semantics=("arbitrary", "arbitrary"),
            vmem_limit_bytes=vmem_limit,
        ),
    )(xp, xp, xp, wt)

    # ---- BN affine parameters (training-mode batch stats, biased variance) ----
    mean = sums / M
    var = sqs / M - mean * mean     # pad channels: sum = sq = 0 -> mean = var = 0
    gamma_p = jnp.pad(gamma.astype(jnp.float32), (0, Cp - Cout)).reshape(1, Cp)
    beta_p = jnp.pad(beta.astype(jnp.float32), (0, Cp - Cout)).reshape(1, Cp)
    scale = gamma_p * jax.lax.rsqrt(var + eps)
    shift = beta_p - mean * scale

    # ---- kernel 2: fused BN affine + ReLU, written in place over conv_out ----
    y = pl.pallas_call(
        _bn_relu_kernel,
        out_shape=jax.ShapeDtypeStruct((N, D, HW, Cp), jnp.float32),
        grid=(N, D),
        in_specs=[
            pl.BlockSpec((None, None, HW, Cp), lambda n, d: (n, d, 0, 0)),
            pl.BlockSpec((1, Cp), lambda n, d: (0, 0)),
            pl.BlockSpec((1, Cp), lambda n, d: (0, 0)),
        ],
        out_specs=pl.BlockSpec((None, None, HW, Cp), lambda n, d: (n, d, 0, 0)),
        input_output_aliases={0: 0},          # reuse the conv_out HBM buffer
        compiler_params=pltpu.CompilerParams(
            dimension_semantics=("parallel", "parallel"),
            vmem_limit_bytes=vmem_limit,
        ),
    )(conv_out, scale, shift)

    # drop channel padding, back to PyTorch NCDHW layout
    y = y[..., :Cout].reshape(N, D, H, W, Cout)
    return jnp.transpose(y, (0, 4, 1, 2, 3))


# ---------------- reference (pure JAX) for a sanity check ----------------

def _reference(x, weight, gamma, beta, eps=1e-5):
    conv = jax.lax.conv_general_dilated(
        x, weight, window_strides=(1, 1, 1),
        padding=((1, 1), (1, 1), (1, 1)),
        dimension_numbers=("NCDHW", "OIDHW", "NCDHW"),
        precision=jax.lax.Precision.HIGHEST,
    )
    mean = conv.mean(axis=(0, 2, 3, 4), keepdims=True)
    var = conv.var(axis=(0, 2, 3, 4), keepdims=True)     # biased, training-mode BN
    xh = (conv - mean) * jax.lax.rsqrt(var + eps)
    y = xh * gamma.reshape(1, -1, 1, 1, 1) + beta.reshape(1, -1, 1, 1, 1)
    return jnp.maximum(y, 0.0)


if __name__ == "__main__":
    key = jax.random.PRNGKey(0)
    k1, k2, k3, k4 = jax.random.split(key, 4)

    N, Cin, Cout, D, H, W = 2, 4, 8, 8, 8, 8
    x = jax.random.normal(k1, (N, Cin, D, H, W), dtype=jnp.float32)
    # Conv3d(in=4, out=8, k=3, bias=False) weight: (Cout, Cin, 3, 3, 3)
    weight = 0.1 * jax.random.normal(k2, (Cout, Cin, 3, 3, 3), dtype=jnp.float32)
    # BatchNorm3d affine params
    gamma = 1.0 + 0.1 * jax.random.normal(k3, (Cout,), dtype=jnp.float32)
    beta = 0.1 * jax.random.normal(k4, (Cout,), dtype=jnp.float32)

    out = jax.block_until_ready(conv_bn_relu_3d(x, weight, gamma, beta))
    assert out.shape == (N, Cout, D, H, W)

    # Primary check: reference with the same bf16-rounded conv inputs the kernel
    # feeds to the MXU (isolates kernel correctness from the requested bf16 cast).
    x_q = x.astype(jnp.bfloat16).astype(jnp.float32)
    w_q = weight.astype(jnp.bfloat16).astype(jnp.float32)
    ref_q = _reference(x_q, w_q, gamma, beta)
    assert jnp.allclose(out, ref_q, atol=2e-2, rtol=2e-2), \
        float(jnp.max(jnp.abs(out - ref_q)))

    # Secondary (loose) check against the full-f32 module semantics.
    ref = _reference(x, weight, gamma, beta)
    assert jnp.allclose(out, ref, atol=6e-2, rtol=6e-2), \
        float(jnp.max(jnp.abs(out - ref)))

    print("KERNEL_OK")
</pallas_src>

<mosaic_0001>
module attributes {stable_mosaic.version = 11 : i64} {
  func.func @_conv_bn_stats_kernel(%arg0: i32, %arg1: i32, %arg2: memref<1x1x10x10x4xbf16, #tpu.memory_space<vmem>>, %arg3: memref<1x1x10x10x4xbf16, #tpu.memory_space<vmem>>, %arg4: memref<1x1x10x10x4xbf16, #tpu.memory_space<vmem>>, %arg5: memref<27x4x128xbf16, #tpu.memory_space<vmem>>, %arg6: memref<1x1x64x128xf32, #tpu.memory_space<vmem>>, %arg7: memref<1x128xf32, #tpu.memory_space<vmem>>, %arg8: memref<1x128xf32, #tpu.memory_space<vmem>>) attributes {dimension_semantics = [#tpu.dimension_semantics<arbitrary>, #tpu.dimension_semantics<arbitrary>], iteration_bounds = array<i64: 2, 8>, scalar_prefetch = 0 : i64, scratch_operands = 0 : i64, tpu.core_type = #tpu.core_type<tc>, window_params = [{transform_indices = @transform_0, window_bounds = array<i64: 1, 1, 10, 10, 4>}, {transform_indices = @transform_1, window_bounds = array<i64: 1, 1, 10, 10, 4>}, {transform_indices = @transform_2, window_bounds = array<i64: 1, 1, 10, 10, 4>}, {pipeline_mode = #tpu.pipeline_mode<synchronous>, transform_indices = @transform_3, window_bounds = array<i64: 27, 4, 128>}, {transform_indices = @transform_4, window_bounds = array<i64: 1, 1, 64, 128>}, {pipeline_mode = #tpu.pipeline_mode<synchronous>, transform_indices = @transform_5, window_bounds = array<i64: 1, 128>}, {pipeline_mode = #tpu.pipeline_mode<synchronous>, transform_indices = @transform_6, window_bounds = array<i64: 1, 128>}]} {
    %c8_i32 = arith.constant 8 : i32
    %0 = arith.muli %arg0, %c8_i32 : i32
    %1 = arith.addi %0, %arg1 : i32
    %c0_i32 = arith.constant 0 : i32
    %2 = arith.cmpi eq, %1, %c0_i32 : i32
    %3 = arith.extui %2 : i1 to i32
    %c0_i32_0 = arith.constant 0 : i32
    %4 = arith.cmpi ne, %3, %c0_i32_0 : i32
    scf.if %4 {
      %cst_111 = arith.constant 0.000000e+00 : f32
      %218 = vector.broadcast %cst_111 : f32 to vector<1x128xf32>
      %c0_112 = arith.constant 0 : index
      %c0_113 = arith.constant 0 : index
      %219 = vector.load %arg7[%c0_112, %c0_113] : memref<1x128xf32, #tpu.memory_space<vmem>>, vector<1x128xf32>
      tpu.vector_store %arg7[%c0_112, %c0_113], %218 {strides = array<i32>} : memref<1x128xf32, #tpu.memory_space<vmem>>, vector<1x128xf32>,
      %cst_114 = arith.constant 0.000000e+00 : f32
      %220 = vector.broadcast %cst_114 : f32 to vector<1x128xf32>
      %c0_115 = arith.constant 0 : index
      %c0_116 = arith.constant 0 : index
      %221 = vector.load %arg8[%c0_115, %c0_116] : memref<1x128xf32, #tpu.memory_space<vmem>>, vector<1x128xf32>
      tpu.vector_store %arg8[%c0_115, %c0_116], %220 {strides = array<i32>} : memref<1x128xf32, #tpu.memory_space<vmem>>, vector<1x128xf32>,
    } else {
    }
    %cst = arith.constant 0.000000e+00 : f32
    %5 = vector.broadcast %cst : f32 to vector<64x128xf32>
    %c0 = arith.constant 0 : index
    %c0_1 = arith.constant 0 : index
    %c0_2 = arith.constant 0 : index
    %c0_3 = arith.constant 0 : index
    %c0_4 = arith.constant 0 : index
    %6 = vector.load %arg2[%c0, %c0_1, %c0_2, %c0_3, %c0_4] : memref<1x1x10x10x4xbf16, #tpu.memory_space<vmem>>, vector<1x1x10x10x4xbf16>
    %7 = vector.shape_cast %6 : vector<1x1x10x10x4xbf16> to vector<10x10x4xbf16>
    %8 = arith.extf %7 : vector<10x10x4xbf16> to vector<10x10x4xf32>
    %9 = vector.extract_strided_slice %8 {offsets = [0, 0, 0], sizes = [8, 8, 4], strides = [1, 1, 1]} : vector<10x10x4xf32> to vector<8x8x4xf32>
    %10 = vector.shape_cast %9 : vector<8x8x4xf32> to vector<64x4xf32>
    %11 = arith.truncf %10 : vector<64x4xf32> to vector<64x4xbf16>
    %c0_5 = arith.constant 0 : index
    %c0_6 = arith.constant 0 : index
    %c0_7 = arith.constant 0 : index
    %12 = vector.load %arg5[%c0_5, %c0_6, %c0_7] : memref<27x4x128xbf16, #tpu.memory_space<vmem>>, vector<1x4x128xbf16>
    %13 = vector.shape_cast %12 : vector<1x4x128xbf16> to vector<4x128xbf16>
    %cst_8 = arith.constant dense<0.000000e+00> : vector<64x128xf32>
    %14 = tpu.matmul %11, %13, %cst_8 {dimension_numbers = #tpu.dot_dimension_numbers<[1], [0], [0], [1], [0, 0, 1, 1], [], []>} : vector<64x4xbf16>, vector<4x128xbf16>, vector<64x128xf32> -> vector<64x128xf32>
    %15 = arith.addf %5, %14 : vector<64x128xf32>
    %16 = vector.extract_strided_slice %8 {offsets = [0, 1, 0], sizes = [8, 8, 4], strides = [1, 1, 1]} : vector<10x10x4xf32> to vector<8x8x4xf32>
    %17 = vector.shape_cast %16 : vector<8x8x4xf32> to vector<64x4xf32>
    %18 = arith.truncf %17 : vector<64x4xf32> to vector<64x4xbf16>
    %c1 = arith.constant 1 : index
    %c0_9 = arith.constant 0 : index
    %c0_10 = arith.constant 0 : index
    %19 = vector.load %arg5[%c1, %c0_9, %c0_10] : memref<27x4x128xbf16, #tpu.memory_space<vmem>>, vector<1x4x128xbf16>
    %20 = vector.shape_cast %19 : vector<1x4x128xbf16> to vector<4x128xbf16>
    %cst_11 = arith.constant dense<0.000000e+00> : vector<64x128xf32>
    %21 = tpu.matmul %18, %20, %cst_11 {dimension_numbers = #tpu.dot_dimension_numbers<[1], [0], [0], [1], [0, 0, 1, 1], [], []>} : vector<64x4xbf16>, vector<4x128xbf16>, vector<64x128xf32> -> vector<64x128xf32>
    %22 = arith.addf %15, %21 : vector<64x128xf32>
    %23 = vector.extract_strided_slice %8 {offsets = [0, 2, 0], sizes = [8, 8, 4], strides = [1, 1, 1]} : vector<10x10x4xf32> to vector<8x8x4xf32>
    %24 = vector.shape_cast %23 : vector<8x8x4xf32> to vector<64x4xf32>
    %25 = arith.truncf %24 : vector<64x4xf32> to vector<64x4xbf16>
    %c2 = arith.constant 2 : index
    %c0_12 = arith.constant 0 : index
    %c0_13 = arith.constant 0 : index
    %26 = vector.load %arg5[%c2, %c0_12, %c0_13] : memref<27x4x128xbf16, #tpu.memory_space<vmem>>, vector<1x4x128xbf16>
    %27 = vector.shape_cast %26 : vector<1x4x128xbf16> to vector<4x128xbf16>
    %cst_14 = arith.constant dense<0.000000e+00> : vector<64x128xf32>
    %28 = tpu.matmul %25, %27, %cst_14 {dimension_numbers = #tpu.dot_dimension_numbers<[1], [0], [0], [1], [0, 0, 1, 1], [], []>} : vector<64x4xbf16>, vector<4x128xbf16>, vector<64x128xf32> -> vector<64x128xf32>
    %29 = arith.addf %22, %28 : vector<64x128xf32>
    %30 = vector.extract_strided_slice %8 {offsets = [1, 0, 0], sizes = [8, 8, 4], strides = [1, 1, 1]} : vector<10x10x4xf32> to vector<8x8x4xf32>
    %31 = vector.shape_cast %30 : vector<8x8x4xf32> to vector<64x4xf32>
    %32 = arith.truncf %31 : vector<64x4xf32> to vector<64x4xbf16>
    %c3 = arith.constant 3 : index
    %c0_15 = arith.constant 0 : index
    %c0_16 = arith.constant 0 : index
    %33 = vector.load %arg5[%c3, %c0_15, %c0_16] : memref<27x4x128xbf16, #tpu.memory_space<vmem>>, vector<1x4x128xbf16>
    %34 = vector.shape_cast %33 : vector<1x4x128xbf16> to vector<4x128xbf16>
    %cst_17 = arith.constant dense<0.000000e+00> : vector<64x128xf32>
    %35 = tpu.matmul %32, %34, %cst_17 {dimension_numbers = #tpu.dot_dimension_numbers<[1], [0], [0], [1], [0, 0, 1, 1], [], []>} : vector<64x4xbf16>, vector<4x128xbf16>, vector<64x128xf32> -> vector<64x128xf32>
    %36 = arith.addf %29, %35 : vector<64x128xf32>
    %37 = vector.extract_strided_slice %8 {offsets = [1, 1, 0], sizes = [8, 8, 4], strides = [1, 1, 1]} : vector<10x10x4xf32> to vector<8x8x4xf32>
    %38 = vector.shape_cast %37 : vector<8x8x4xf32> to vector<64x4xf32>
    %39 = arith.truncf %38 : vector<64x4xf32> to vector<64x4xbf16>
    %c4 = arith.constant 4 : index
    %c0_18 = arith.constant 0 : index
    %c0_19 = arith.constant 0 : index
    %40 = vector.load %arg5[%c4, %c0_18, %c0_19] : memref<27x4x128xbf16, #tpu.memory_space<vmem>>, vector<1x4x128xbf16>
    %41 = vector.shape_cast %40 : vector<1x4x128xbf16> to vector<4x128xbf16>
    %cst_20 = arith.constant dense<0.000000e+00> : vector<64x128xf32>
    %42 = tpu.matmul %39, %41, %cst_20 {dimension_numbers = #tpu.dot_dimension_numbers<[1], [0], [0], [1], [0, 0, 1, 1], [], []>} : vector<64x4xbf16>, vector<4x128xbf16>, vector<64x128xf32> -> vector<64x128xf32>
    %43 = arith.addf %36, %42 : vector<64x128xf32>
    %44 = vector.extract_strided_slice %8 {offsets = [1, 2, 0], sizes = [8, 8, 4], strides = [1, 1, 1]} : vector<10x10x4xf32> to vector<8x8x4xf32>
    %45 = vector.shape_cast %44 : vector<8x8x4xf32> to vector<64x4xf32>
    %46 = arith.truncf %45 : vector<64x4xf32> to vector<64x4xbf16>
    %c5 = arith.constant 5 : index
    %c0_21 = arith.constant 0 : index
    %c0_22 = arith.constant 0 : index
    %47 = vector.load %arg5[%c5, %c0_21, %c0_22] : memref<27x4x128xbf16, #tpu.memory_space<vmem>>, vector<1x4x128xbf16>
    %48 = vector.shape_cast %47 : vector<1x4x128xbf16> to vector<4x128xbf16>
    %cst_23 = arith.constant dense<0.000000e+00> : vector<64x128xf32>
    %49 = tpu.matmul %46, %48, %cst_23 {dimension_numbers = #tpu.dot_dimension_numbers<[1], [0], [0], [1], [0, 0, 1, 1], [], []>} : vector<64x4xbf16>, vector<4x128xbf16>, vector<64x128xf32> -> vector<64x128xf32>
    %50 = arith.addf %43, %49 : vector<64x128xf32>
    %51 = vector.extract_strided_slice %8 {offsets = [2, 0, 0], sizes = [8, 8, 4], strides = [1, 1, 1]} : vector<10x10x4xf32> to vector<8x8x4xf32>
    %52 = vector.shape_cast %51 : vector<8x8x4xf32> to vector<64x4xf32>
    %53 = arith.truncf %52 : vector<64x4xf32> to vector<64x4xbf16>
    %c6 = arith.constant 6 : index
    %c0_24 = arith.constant 0 : index
    %c0_25 = arith.constant 0 : index
    %54 = vector.load %arg5[%c6, %c0_24, %c0_25] : memref<27x4x128xbf16, #tpu.memory_space<vmem>>, vector<1x4x128xbf16>
    %55 = vector.shape_cast %54 : vector<1x4x128xbf16> to vector<4x128xbf16>
    %cst_26 = arith.constant dense<0.000000e+00> : vector<64x128xf32>
    %56 = tpu.matmul %53, %55, %cst_26 {dimension_numbers = #tpu.dot_dimension_numbers<[1], [0], [0], [1], [0, 0, 1, 1], [], []>} : vector<64x4xbf16>, vector<4x128xbf16>, vector<64x128xf32> -> vector<64x128xf32>
    %57 = arith.addf %50, %56 : vector<64x128xf32>
    %58 = vector.extract_strided_slice %8 {offsets = [2, 1, 0], sizes = [8, 8, 4], strides = [1, 1, 1]} : vector<10x10x4xf32> to vector<8x8x4xf32>
    %59 = vector.shape_cast %58 : vector<8x8x4xf32> to vector<64x4xf32>
    %60 = arith.truncf %59 : vector<64x4xf32> to vector<64x4xbf16>
    %c7 = arith.constant 7 : index
    %c0_27 = arith.constant 0 : index
    %c0_28 = arith.constant 0 : index
    %61 = vector.load %arg5[%c7, %c0_27, %c0_28] : memref<27x4x128xbf16, #tpu.memory_space<vmem>>, vector<1x4x128xbf16>
    %62 = vector.shape_cast %61 : vector<1x4x128xbf16> to vector<4x128xbf16>
    %cst_29 = arith.constant dense<0.000000e+00> : vector<64x128xf32>
    %63 = tpu.matmul %60, %62, %cst_29 {dimension_numbers = #tpu.dot_dimension_numbers<[1], [0], [0], [1], [0, 0, 1, 1], [], []>} : vector<64x4xbf16>, vector<4x128xbf16>, vector<64x128xf32> -> vector<64x128xf32>
    %64 = arith.addf %57, %63 : vector<64x128xf32>
    %65 = vector.extract_strided_slice %8 {offsets = [2, 2, 0], sizes = [8, 8, 4], strides = [1, 1, 1]} : vector<10x10x4xf32> to vector<8x8x4xf32>
    %66 = vector.shape_cast %65 : vector<8x8x4xf32> to vector<64x4xf32>
    %67 = arith.truncf %66 : vector<64x4xf32> to vector<64x4xbf16>
    %c8 = arith.constant 8 : index
    %c0_30 = arith.constant 0 : index
    %c0_31 = arith.constant 0 : index
    %68 = vector.load %arg5[%c8, %c0_30, %c0_31] : memref<27x4x128xbf16, #tpu.memory_space<vmem>>, vector<1x4x128xbf16>
    %69 = vector.shape_cast %68 : vector<1x4x128xbf16> to vector<4x128xbf16>
    %cst_32 = arith.constant dense<0.000000e+00> : vector<64x128xf32>
    %70 = tpu.matmul %67, %69, %cst_32 {dimension_numbers = #tpu.dot_dimension_numbers<[1], [0], [0], [1], [0, 0, 1, 1], [], []>} : vector<64x4xbf16>, vector<4x128xbf16>, vector<64x128xf32> -> vector<64x128xf32>
    %71 = arith.addf %64, %70 : vector<64x128xf32>
    %c0_33 = arith.constant 0 : index
    %c0_34 = arith.constant 0 : index
    %c0_35 = arith.constant 0 : index
    %c0_36 = arith.constant 0 : index
    %c0_37 = arith.constant 0 : index
    %72 = vector.load %arg3[%c0_33, %c0_34, %c0_35, %c0_36, %c0_37] : memref<1x1x10x10x4xbf16, #tpu.memory_space<vmem>>, vector<1x1x10x10x4xbf16>
    %73 = vector.shape_cast %72 : vector<1x1x10x10x4xbf16> to vector<10x10x4xbf16>
    %74 = arith.extf %73 : vector<10x10x4xbf16> to vector<10x10x4xf32>
    %75 = vector.extract_strided_slice %74 {offsets = [0, 0, 0], sizes = [8, 8, 4], strides = [1, 1, 1]} : vector<10x10x4xf32> to vector<8x8x4xf32>
    %76 = vector.shape_cast %75 : vector<8x8x4xf32> to vector<64x4xf32>
    %77 = arith.truncf %76 : vector<64x4xf32> to vector<64x4xbf16>
    %c9 = arith.constant 9 : index
    %c0_38 = arith.constant 0 : index
    %c0_39 = arith.constant 0 : index
    %78 = vector.load %arg5[%c9, %c0_38, %c0_39] : memref<27x4x128xbf16, #tpu.memory_space<vmem>>, vector<1x4x128xbf16>
    %79 = vector.shape_cast %78 : vector<1x4x128xbf16> to vector<4x128xbf16>
    %cst_40 = arith.constant dense<0.000000e+00> : vector<64x128xf32>
    %80 = tpu.matmul %77, %79, %cst_40 {dimension_numbers = #tpu.dot_dimension_numbers<[1], [0], [0], [1], [0, 0, 1, 1], [], []>} : vector<64x4xbf16>, vector<4x128xbf16>, vector<64x128xf32> -> vector<64x128xf32>
    %81 = arith.addf %71, %80 : vector<64x128xf32>
    %82 = vector.extract_strided_slice %74 {offsets = [0, 1, 0], sizes = [8, 8, 4], strides = [1, 1, 1]} : vector<10x10x4xf32> to vector<8x8x4xf32>
    %83 = vector.shape_cast %82 : vector<8x8x4xf32> to vector<64x4xf32>
    %84 = arith.truncf %83 : vector<64x4xf32> to vector<64x4xbf16>
    %c10 = arith.constant 10 : index
    %c0_41 = arith.constant 0 : index
    %c0_42 = arith.constant 0 : index
    %85 = vector.load %arg5[%c10, %c0_41, %c0_42] : memref<27x4x128xbf16, #tpu.memory_space<vmem>>, vector<1x4x128xbf16>
    %86 = vector.shape_cast %85 : vector<1x4x128xbf16> to vector<4x128xbf16>
    %cst_43 = arith.constant dense<0.000000e+00> : vector<64x128xf32>
    %87 = tpu.matmul %84, %86, %cst_43 {dimension_numbers = #tpu.dot_dimension_numbers<[1], [0], [0], [1], [0, 0, 1, 1], [], []>} : vector<64x4xbf16>, vector<4x128xbf16>, vector<64x128xf32> -> vector<64x128xf32>
    %88 = arith.addf %81, %87 : vector<64x128xf32>
    %89 = vector.extract_strided_slice %74 {offsets = [0, 2, 0], sizes = [8, 8, 4], strides = [1, 1, 1]} : vector<10x10x4xf32> to vector<8x8x4xf32>
    %90 = vector.shape_cast %89 : vector<8x8x4xf32> to vector<64x4xf32>
    %91 = arith.truncf %90 : vector<64x4xf32> to vector<64x4xbf16>
    %c11 = arith.constant 11 : index
    %c0_44 = arith.constant 0 : index
    %c0_45 = arith.constant 0 : index
    %92 = vector.load %arg5[%c11, %c0_44, %c0_45] : memref<27x4x128xbf16, #tpu.memory_space<vmem>>, vector<1x4x128xbf16>
    %93 = vector.shape_cast %92 : vector<1x4x128xbf16> to vector<4x128xbf16>
    %cst_46 = arith.constant dense<0.000000e+00> : vector<64x128xf32>
    %94 = tpu.matmul %91, %93, %cst_46 {dimension_numbers = #tpu.dot_dimension_numbers<[1], [0], [0], [1], [0, 0, 1, 1], [], []>} : vector<64x4xbf16>, vector<4x128xbf16>, vector<64x128xf32> -> vector<64x128xf32>
    %95 = arith.addf %88, %94 : vector<64x128xf32>
    %96 = vector.extract_strided_slice %74 {offsets = [1, 0, 0], sizes = [8, 8, 4], strides = [1, 1, 1]} : vector<10x10x4xf32> to vector<8x8x4xf32>
    %97 = vector.shape_cast %96 : vector<8x8x4xf32> to vector<64x4xf32>
    %98 = arith.truncf %97 : vector<64x4xf32> to vector<64x4xbf16>
    %c12 = arith.constant 12 : index
    %c0_47 = arith.constant 0 : index
    %c0_48 = arith.constant 0 : index
    %99 = vector.load %arg5[%c12, %c0_47, %c0_48] : memref<27x4x128xbf16, #tpu.memory_space<vmem>>, vector<1x4x128xbf16>
    %100 = vector.shape_cast %99 : vector<1x4x128xbf16> to vector<4x128xbf16>
    %cst_49 = arith.constant dense<0.000000e+00> : vector<64x128xf32>
    %101 = tpu.matmul %98, %100, %cst_49 {dimension_numbers = #tpu.dot_dimension_numbers<[1], [0], [0], [1], [0, 0, 1, 1], [], []>} : vector<64x4xbf16>, vector<4x128xbf16>, vector<64x128xf32> -> vector<64x128xf32>
    %102 = arith.addf %95, %101 : vector<64x128xf32>
    %103 = vector.extract_strided_slice %74 {offsets = [1, 1, 0], sizes = [8, 8, 4], strides = [1, 1, 1]} : vector<10x10x4xf32> to vector<8x8x4xf32>
    %104 = vector.shape_cast %103 : vector<8x8x4xf32> to vector<64x4xf32>
    %105 = arith.truncf %104 : vector<64x4xf32> to vector<64x4xbf16>
    %c13 = arith.constant 13 : index
    %c0_50 = arith.constant 0 : index
    %c0_51 = arith.constant 0 : index
    %106 = vector.load %arg5[%c13, %c0_50, %c0_51] : memref<27x4x128xbf16, #tpu.memory_space<vmem>>, vector<1x4x128xbf16>
    %107 = vector.shape_cast %106 : vector<1x4x128xbf16> to vector<4x128xbf16>
    %cst_52 = arith.constant dense<0.000000e+00> : vector<64x128xf32>
    %108 = tpu.matmul %105, %107, %cst_52 {dimension_numbers = #tpu.dot_dimension_numbers<[1], [0], [0], [1], [0, 0, 1, 1], [], []>} : vector<64x4xbf16>, vector<4x128xbf16>, vector<64x128xf32> -> vector<64x128xf32>
    %109 = arith.addf %102, %108 : vector<64x128xf32>
    %110 = vector.extract_strided_slice %74 {offsets = [1, 2, 0], sizes = [8, 8, 4], strides = [1, 1, 1]} : vector<10x10x4xf32> to vector<8x8x4xf32>
    %111 = vector.shape_cast %110 : vector<8x8x4xf32> to vector<64x4xf32>
    %112 = arith.truncf %111 : vector<64x4xf32> to vector<64x4xbf16>
    %c14 = arith.constant 14 : index
    %c0_53 = arith.constant 0 : index
    %c0_54 = arith.constant 0 : index
    %113 = vector.load %arg5[%c14, %c0_53, %c0_54] : memref<27x4x128xbf16, #tpu.memory_space<vmem>>, vector<1x4x128xbf16>
    %114 = vector.shape_cast %113 : vector<1x4x128xbf16> to vector<4x128xbf16>
    %cst_55 = arith.constant dense<0.000000e+00> : vector<64x128xf32>
    %115 = tpu.matmul %112, %114, %cst_55 {dimension_numbers = #tpu.dot_dimension_numbers<[1], [0], [0], [1], [0, 0, 1, 1], [], []>} : vector<64x4xbf16>, vector<4x128xbf16>, vector<64x128xf32> -> vector<64x128xf32>
    %116 = arith.addf %109, %115 : vector<64x128xf32>
    %117 = vector.extract_strided_slice %74 {offsets = [2, 0, 0], sizes = [8, 8, 4], strides = [1, 1, 1]} : vector<10x10x4xf32> to vector<8x8x4xf32>
    %118 = vector.shape_cast %117 : vector<8x8x4xf32> to vector<64x4xf32>
    %119 = arith.truncf %118 : vector<64x4xf32> to vector<64x4xbf16>
    %c15 = arith.constant 15 : index
    %c0_56 = arith.constant 0 : index
    %c0_57 = arith.constant 0 : index
    %120 = vector.load %arg5[%c15, %c0_56, %c0_57] : memref<27x4x128xbf16, #tpu.memory_space<vmem>>, vector<1x4x128xbf16>
    %121 = vector.shape_cast %120 : vector<1x4x128xbf16> to vector<4x128xbf16>
    %cst_58 = arith.constant dense<0.000000e+00> : vector<64x128xf32>
    %122 = tpu.matmul %119, %121, %cst_58 {dimension_numbers = #tpu.dot_dimension_numbers<[1], [0], [0], [1], [0, 0, 1, 1], [], []>} : vector<64x4xbf16>, vector<4x128xbf16>, vector<64x128xf32> -> vector<64x128xf32>
    %123 = arith.addf %116, %122 : vector<64x128xf32>
    %124 = vector.extract_strided_slice %74 {offsets = [2, 1, 0], sizes = [8, 8, 4], strides = [1, 1, 1]} : vector<10x10x4xf32> to vector<8x8x4xf32>
    %125 = vector.shape_cast %124 : vector<8x8x4xf32> to vector<64x4xf32>
    %126 = arith.truncf %125 : vector<64x4xf32> to vector<64x4xbf16>
    %c16 = arith.constant 16 : index
    %c0_59 = arith.constant 0 : index
    %c0_60 = arith.constant 0 : index
    %127 = vector.load %arg5[%c16, %c0_59, %c0_60] : memref<27x4x128xbf16, #tpu.memory_space<vmem>>, vector<1x4x128xbf16>
    %128 = vector.shape_cast %127 : vector<1x4x128xbf16> to vector<4x128xbf16>
    %cst_61 = arith.constant dense<0.000000e+00> : vector<64x128xf32>
    %129 = tpu.matmul %126, %128, %cst_61 {dimension_numbers = #tpu.dot_dimension_numbers<[1], [0], [0], [1], [0, 0, 1, 1], [], []>} : vector<64x4xbf16>, vector<4x128xbf16>, vector<64x128xf32> -> vector<64x128xf32>
    %130 = arith.addf %123, %129 : vector<64x128xf32>
    %131 = vector.extract_strided_slice %74 {offsets = [2, 2, 0], sizes = [8, 8, 4], strides = [1, 1, 1]} : vector<10x10x4xf32> to vector<8x8x4xf32>
    %132 = vector.shape_cast %131 : vector<8x8x4xf32> to vector<64x4xf32>
    %133 = arith.truncf %132 : vector<64x4xf32> to vector<64x4xbf16>
    %c17 = arith.constant 17 : index
    %c0_62 = arith.constant 0 : index
    %c0_63 = arith.constant 0 : index
    %134 = vector.load %arg5[%c17, %c0_62, %c0_63] : memref<27x4x128xbf16, #tpu.memory_space<vmem>>, vector<1x4x128xbf16>
    %135 = vector.shape_cast %134 : vector<1x4x128xbf16> to vector<4x128xbf16>
    %cst_64 = arith.constant dense<0.000000e+00> : vector<64x128xf32>
    %136 = tpu.matmul %133, %135, %cst_64 {dimension_numbers = #tpu.dot_dimension_numbers<[1], [0], [0], [1], [0, 0, 1, 1], [], []>} : vector<64x4xbf16>, vector<4x128xbf16>, vector<64x128xf32> -> vector<64x128xf32>
    %137 = arith.addf %130, %136 : vector<64x128xf32>
    %c0_65 = arith.constant 0 : index
    %c0_66 = arith.constant 0 : index
    %c0_67 = arith.constant 0 : index
    %c0_68 = arith.constant 0 : index
    %c0_69 = arith.constant 0 : index
    %138 = vector.load %arg4[%c0_65, %c0_66, %c0_67, %c0_68, %c0_69] : memref<1x1x10x10x4xbf16, #tpu.memory_space<vmem>>, vector<1x1x10x10x4xbf16>
    %139 = vector.shape_cast %138 : vector<1x1x10x10x4xbf16> to vector<10x10x4xbf16>
    %140 = arith.extf %139 : vector<10x10x4xbf16> to vector<10x10x4xf32>
    %141 = vector.extract_strided_slice %140 {offsets = [0, 0, 0], sizes = [8, 8, 4], strides = [1, 1, 1]} : vector<10x10x4xf32> to vector<8x8x4xf32>
    %142 = vector.shape_cast %141 : vector<8x8x4xf32> to vector<64x4xf32>
    %143 = arith.truncf %142 : vector<64x4xf32> to vector<64x4xbf16>
    %c18 = arith.constant 18 : index
    %c0_70 = arith.constant 0 : index
    %c0_71 = arith.constant 0 : index
    %144 = vector.load %arg5[%c18, %c0_70, %c0_71] : memref<27x4x128xbf16, #tpu.memory_space<vmem>>, vector<1x4x128xbf16>
    %145 = vector.shape_cast %144 : vector<1x4x128xbf16> to vector<4x128xbf16>
    %cst_72 = arith.constant dense<0.000000e+00> : vector<64x128xf32>
    %146 = tpu.matmul %143, %145, %cst_72 {dimension_numbers = #tpu.dot_dimension_numbers<[1], [0], [0], [1], [0, 0, 1, 1], [], []>} : vector<64x4xbf16>, vector<4x128xbf16>, vector<64x128xf32> -> vector<64x128xf32>
    %147 = arith.addf %137, %146 : vector<64x128xf32>
    %148 = vector.extract_strided_slice %140 {offsets = [0, 1, 0], sizes = [8, 8, 4], strides = [1, 1, 1]} : vector<10x10x4xf32> to vector<8x8x4xf32>
    %149 = vector.shape_cast %148 : vector<8x8x4xf32> to vector<64x4xf32>
    %150 = arith.truncf %149 : vector<64x4xf32> to vector<64x4xbf16>
    %c19 = arith.constant 19 : index
    %c0_73 = arith.constant 0 : index
    %c0_74 = arith.constant 0 : index
    %151 = vector.load %arg5[%c19, %c0_73, %c0_74] : memref<27x4x128xbf16, #tpu.memory_space<vmem>>, vector<1x4x128xbf16>
    %152 = vector.shape_cast %151 : vector<1x4x128xbf16> to vector<4x128xbf16>
    %cst_75 = arith.constant dense<0.000000e+00> : vector<64x128xf32>
    %153 = tpu.matmul %150, %152, %cst_75 {dimension_numbers = #tpu.dot_dimension_numbers<[1], [0], [0], [1], [0, 0, 1, 1], [], []>} : vector<64x4xbf16>, vector<4x128xbf16>, vector<64x128xf32> -> vector<64x128xf32>
    %154 = arith.addf %147, %153 : vector<64x128xf32>
    %155 = vector.extract_strided_slice %140 {offsets = [0, 2, 0], sizes = [8, 8, 4], strides = [1, 1, 1]} : vector<10x10x4xf32> to vector<8x8x4xf32>
    %156 = vector.shape_cast %155 : vector<8x8x4xf32> to vector<64x4xf32>
    %157 = arith.truncf %156 : vector<64x4xf32> to vector<64x4xbf16>
    %c20 = arith.constant 20 : index
    %c0_76 = arith.constant 0 : index
    %c0_77 = arith.constant 0 : index
    %158 = vector.load %arg5[%c20, %c0_76, %c0_77] : memref<27x4x128xbf16, #tpu.memory_space<vmem>>, vector<1x4x128xbf16>
    %159 = vector.shape_cast %158 : vector<1x4x128xbf16> to vector<4x128xbf16>
    %cst_78 = arith.constant dense<0.000000e+00> : vector<64x128xf32>
    %160 = tpu.matmul %157, %159, %cst_78 {dimension_numbers = #tpu.dot_dimension_numbers<[1], [0], [0], [1], [0, 0, 1, 1], [], []>} : vector<64x4xbf16>, vector<4x128xbf16>, vector<64x128xf32> -> vector<64x128xf32>
    %161 = arith.addf %154, %160 : vector<64x128xf32>
    %162 = vector.extract_strided_slice %140 {offsets = [1, 0, 0], sizes = [8, 8, 4], strides = [1, 1, 1]} : vector<10x10x4xf32> to vector<8x8x4xf32>
    %163 = vector.shape_cast %162 : vector<8x8x4xf32> to vector<64x4xf32>
    %164 = arith.truncf %163 : vector<64x4xf32> to vector<64x4xbf16>
    %c21 = arith.constant 21 : index
    %c0_79 = arith.constant 0 : index
    %c0_80 = arith.constant 0 : index
    %165 = vector.load %arg5[%c21, %c0_79, %c0_80] : memref<27x4x128xbf16, #tpu.memory_space<vmem>>, vector<1x4x128xbf16>
    %166 = vector.shape_cast %165 : vector<1x4x128xbf16> to vector<4x128xbf16>
    %cst_81 = arith.constant dense<0.000000e+00> : vector<64x128xf32>
    %167 = tpu.matmul %164, %166, %cst_81 {dimension_numbers = #tpu.dot_dimension_numbers<[1], [0], [0], [1], [0, 0, 1, 1], [], []>} : vector<64x4xbf16>, vector<4x128xbf16>, vector<64x128xf32> -> vector<64x128xf32>
    %168 = arith.addf %161, %167 : vector<64x128xf32>
    %169 = vector.extract_strided_slice %140 {offsets = [1, 1, 0], sizes = [8, 8, 4], strides = [1, 1, 1]} : vector<10x10x4xf32> to vector<8x8x4xf32>
    %170 = vector.shape_cast %169 : vector<8x8x4xf32> to vector<64x4xf32>
    %171 = arith.truncf %170 : vector<64x4xf32> to vector<64x4xbf16>
    %c22 = arith.constant 22 : index
    %c0_82 = arith.constant 0 : index
    %c0_83 = arith.constant 0 : index
    %172 = vector.load %arg5[%c22, %c0_82, %c0_83] : memref<27x4x128xbf16, #tpu.memory_space<vmem>>, vector<1x4x128xbf16>
    %173 = vector.shape_cast %172 : vector<1x4x128xbf16> to vector<4x128xbf16>
    %cst_84 = arith.constant dense<0.000000e+00> : vector<64x128xf32>
    %174 = tpu.matmul %171, %173, %cst_84 {dimension_numbers = #tpu.dot_dimension_numbers<[1], [0], [0], [1], [0, 0, 1, 1], [], []>} : vector<64x4xbf16>, vector<4x128xbf16>, vector<64x128xf32> -> vector<64x128xf32>
    %175 = arith.addf %168, %174 : vector<64x128xf32>
    %176 = vector.extract_strided_slice %140 {offsets = [1, 2, 0], sizes = [8, 8, 4], strides = [1, 1, 1]} : vector<10x10x4xf32> to vector<8x8x4xf32>
    %177 = vector.shape_cast %176 : vector<8x8x4xf32> to vector<64x4xf32>
    %178 = arith.truncf %177 : vector<64x4xf32> to vector<64x4xbf16>
    %c23 = arith.constant 23 : index
    %c0_85 = arith.constant 0 : index
    %c0_86 = arith.constant 0 : index
    %179 = vector.load %arg5[%c23, %c0_85, %c0_86] : memref<27x4x128xbf16, #tpu.memory_space<vmem>>, vector<1x4x128xbf16>
    %180 = vector.shape_cast %179 : vector<1x4x128xbf16> to vector<4x128xbf16>
    %cst_87 = arith.constant dense<0.000000e+00> : vector<64x128xf32>
    %181 = tpu.matmul %178, %180, %cst_87 {dimension_numbers = #tpu.dot_dimension_numbers<[1], [0], [0], [1], [0, 0, 1, 1], [], []>} : vector<64x4xbf16>, vector<4x128xbf16>, vector<64x128xf32> -> vector<64x128xf32>
    %182 = arith.addf %175, %181 : vector<64x128xf32>
    %183 = vector.extract_strided_slice %140 {offsets = [2, 0, 0], sizes = [8, 8, 4], strides = [1, 1, 1]} : vector<10x10x4xf32> to vector<8x8x4xf32>
    %184 = vector.shape_cast %183 : vector<8x8x4xf32> to vector<64x4xf32>
    %185 = arith.truncf %184 : vector<64x4xf32> to vector<64x4xbf16>
    %c24 = arith.constant 24 : index
    %c0_88 = arith.constant 0 : index
    %c0_89 = arith.constant 0 : index
    %186 = vector.load %arg5[%c24, %c0_88, %c0_89] : memref<27x4x128xbf16, #tpu.memory_space<vmem>>, vector<1x4x128xbf16>
    %187 = vector.shape_cast %186 : vector<1x4x128xbf16> to vector<4x128xbf16>
    %cst_90 = arith.constant dense<0.000000e+00> : vector<64x128xf32>
    %188 = tpu.matmul %185, %187, %cst_90 {dimension_numbers = #tpu.dot_dimension_numbers<[1], [0], [0], [1], [0, 0, 1, 1], [], []>} : vector<64x4xbf16>, vector<4x128xbf16>, vector<64x128xf32> -> vector<64x128xf32>
    %189 = arith.addf %182, %188 : vector<64x128xf32>
    %190 = vector.extract_strided_slice %140 {offsets = [2, 1, 0], sizes = [8, 8, 4], strides = [1, 1, 1]} : vector<10x10x4xf32> to vector<8x8x4xf32>
    %191 = vector.shape_cast %190 : vector<8x8x4xf32> to vector<64x4xf32>
    %192 = arith.truncf %191 : vector<64x4xf32> to vector<64x4xbf16>
    %c25 = arith.constant 25 : index
    %c0_91 = arith.constant 0 : index
    %c0_92 = arith.constant 0 : index
    %193 = vector.load %arg5[%c25, %c0_91, %c0_92] : memref<27x4x128xbf16, #tpu.memory_space<vmem>>, vector<1x4x128xbf16>
    %194 = vector.shape_cast %193 : vector<1x4x128xbf16> to vector<4x128xbf16>
    %cst_93 = arith.constant dense<0.000000e+00> : vector<64x128xf32>
    %195 = tpu.matmul %192, %194, %cst_93 {dimension_numbers = #tpu.dot_dimension_numbers<[1], [0], [0], [1], [0, 0, 1, 1], [], []>} : vector<64x4xbf16>, vector<4x128xbf16>, vector<64x128xf32> -> vector<64x128xf32>
    %196 = arith.addf %189, %195 : vector<64x128xf32>
    %197 = vector.extract_strided_slice %140 {offsets = [2, 2, 0], sizes = [8, 8, 4], strides = [1, 1, 1]} : vector<10x10x4xf32> to vector<8x8x4xf32>
    %198 = vector.shape_cast %197 : vector<8x8x4xf32> to vector<64x4xf32>
    %199 = arith.truncf %198 : vector<64x4xf32> to vector<64x4xbf16>
    %c26 = arith.constant 26 : index
    %c0_94 = arith.constant 0 : index
    %c0_95 = arith.constant 0 : index
    %200 = vector.load %arg5[%c26, %c0_94, %c0_95] : memref<27x4x128xbf16, #tpu.memory_space<vmem>>, vector<1x4x128xbf16>
    %201 = vector.shape_cast %200 : vector<1x4x128xbf16> to vector<4x128xbf16>
    %cst_96 = arith.constant dense<0.000000e+00> : vector<64x128xf32>
    %202 = tpu.matmul %199, %201, %cst_96 {dimension_numbers = #tpu.dot_dimension_numbers<[1], [0], [0], [1], [0, 0, 1, 1], [], []>} : vector<64x4xbf16>, vector<4x128xbf16>, vector<64x128xf32> -> vector<64x128xf32>
    %203 = arith.addf %196, %202 : vector<64x128xf32>
    %c0_97 = arith.constant 0 : index
    %c0_98 = arith.constant 0 : index
    %c0_99 = arith.constant 0 : index
    %c0_100 = arith.constant 0 : index
    %204 = vector.load %arg6[%c0_97, %c0_98, %c0_99, %c0_100] : memref<1x1x64x128xf32, #tpu.memory_space<vmem>>, vector<1x1x64x128xf32>
    %205 = vector.shape_cast %204 : vector<1x1x64x128xf32> to vector<64x128xf32>
    %206 = vector.shape_cast %203 : vector<64x128xf32> to vector<1x1x64x128xf32>
    tpu.vector_store %arg6[%c0_97, %c0_98, %c0_99, %c0_100], %206 {strides = array<i32>} : memref<1x1x64x128xf32, #tpu.memory_space<vmem>>, vector<1x1x64x128xf32>,
    %c0_101 = arith.constant 0 : index
    %c0_102 = arith.constant 0 : index
    %207 = vector.load %arg7[%c0_101, %c0_102] : memref<1x128xf32, #tpu.memory_space<vmem>>, vector<1x128xf32>
    %cst_103 = arith.constant dense<0.000000e+00> : vector<128xf32>
    %208 = vector.multi_reduction <add>, %203, %cst_103 [0] : vector<64x128xf32> to vector<128xf32>
    %209 = vector.shape_cast %208 : vector<128xf32> to vector<1x128xf32>
    %210 = arith.addf %207, %209 : vector<1x128xf32>
    %c0_104 = arith.constant 0 : index
    %c0_105 = arith.constant 0 : index
    %211 = vector.load %arg7[%c0_104, %c0_105] : memref<1x128xf32, #tpu.memory_space<vmem>>, vector<1x128xf32>
    tpu.vector_store %arg7[%c0_104, %c0_105], %210 {strides = array<i32>} : memref<1x128xf32, #tpu.memory_space<vmem>>, vector<1x128xf32>,
    %c0_106 = arith.constant 0 : index
    %c0_107 = arith.constant 0 : index
    %212 = vector.load %arg8[%c0_106, %c0_107] : memref<1x128xf32, #tpu.memory_space<vmem>>, vector<1x128xf32>
    %213 = arith.mulf %203, %203 : vector<64x128xf32>
    %cst_108 = arith.constant dense<0.000000e+00> : vector<128xf32>
    %214 = vector.multi_reduction <add>, %213, %cst_108 [0] : vector<64x128xf32> to vector<128xf32>
    %215 = vector.shape_cast %214 : vector<128xf32> to vector<1x128xf32>
    %216 = arith.addf %212, %215 : vector<1x128xf32>
    %c0_109 = arith.constant 0 : index
    %c0_110 = arith.constant 0 : index
    %217 = vector.load %arg8[%c0_109, %c0_110] : memref<1x128xf32, #tpu.memory_space<vmem>>, vector<1x128xf32>
    tpu.vector_store %arg8[%c0_109, %c0_110], %216 {strides = array<i32>} : memref<1x128xf32, #tpu.memory_space<vmem>>, vector<1x128xf32>,
    return
  }
  func.func @transform_0(%arg0: i32, %arg1: i32) -> (i32, i32, i32, i32, i32) {
    %c0_i32 = arith.constant 0 : i32
    %0 = arith.addi %arg1, %c0_i32 : i32
    %c0_i32_0 = arith.constant 0 : i32
    %c0_i32_1 = arith.constant 0 : i32
    %c0_i32_2 = arith.constant 0 : i32
    %c0_i32_3 = arith.constant 0 : i32
    return %arg0, %0, %c0_i32_0, %c0_i32_1, %c0_i32_2 : i32, i32, i32, i32, i32
  }
  func.func @transform_1(%arg0: i32, %arg1: i32) -> (i32, i32, i32, i32, i32) {
    %c1_i32 = arith.constant 1 : i32
    %0 = arith.addi %arg1, %c1_i32 : i32
    %c0_i32 = arith.constant 0 : i32
    %c0_i32_0 = arith.constant 0 : i32
    %c0_i32_1 = arith.constant 0 : i32
    %c0_i32_2 = arith.constant 0 : i32
    return %arg0, %0, %c0_i32, %c0_i32_0, %c0_i32_1 : i32, i32, i32, i32, i32
  }
  func.func @transform_2(%arg0: i32, %arg1: i32) -> (i32, i32, i32, i32, i32) {
    %c2_i32 = arith.constant 2 : i32
    %0 = arith.addi %arg1, %c2_i32 : i32
    %c0_i32 = arith.constant 0 : i32
    %c0_i32_0 = arith.constant 0 : i32
    %c0_i32_1 = arith.constant 0 : i32
    %c0_i32_2 = arith.constant 0 : i32
    return %arg0, %0, %c0_i32, %c0_i32_0, %c0_i32_1 : i32, i32, i32, i32, i32
  }
  func.func @transform_3(%arg0: i32, %arg1: i32) -> (i32, i32, i32) {
    %c0_i32 = arith.constant 0 : i32
    %c0_i32_0 = arith.constant 0 : i32
    %c0_i32_1 = arith.constant 0 : i32
    %c0_i32_2 = arith.constant 0 : i32
    return %c0_i32, %c0_i32_0, %c0_i32_1 : i32, i32, i32
  }
  func.func @transform_4(%arg0: i32, %arg1: i32) -> (i32, i32, i32, i32) {
    %c0_i32 = arith.constant 0 : i32
    %c0_i32_0 = arith.constant 0 : i32
    %c0_i32_1 = arith.constant 0 : i32
    return %arg0, %arg1, %c0_i32, %c0_i32_0 : i32, i32, i32, i32
  }
  func.func @transform_5(%arg0: i32, %arg1: i32) -> (i32, i32) {
    %c0_i32 = arith.constant 0 : i32
    %c0_i32_0 = arith.constant 0 : i32
    %c0_i32_1 = arith.constant 0 : i32
    return %c0_i32, %c0_i32_0 : i32, i32
  }
  func.func @transform_6(%arg0: i32, %arg1: i32) -> (i32, i32) {
    %c0_i32 = arith.constant 0 : i32
    %c0_i32_0 = arith.constant 0 : i32
    %c0_i32_1 = arith.constant 0 : i32
    return %c0_i32, %c0_i32_0 : i32, i32
  }
}

module attributes {stable_mosaic.version = 11 : i64} {
  func.func @_bn_relu_kernel(%arg0: i32, %arg1: i32, %arg2: memref<1x1x64x128xf32, #tpu.memory_space<vmem>>, %arg3: memref<1x128xf32, #tpu.memory_space<vmem>>, %arg4: memref<1x128xf32, #tpu.memory_space<vmem>>, %arg5: memref<1x1x64x128xf32, #tpu.memory_space<vmem>>) attributes {dimension_semantics = [#tpu.dimension_semantics<parallel>, #tpu.dimension_semantics<parallel>], iteration_bounds = array<i64: 2, 8>, scalar_prefetch = 0 : i64, scratch_operands = 0 : i64, tpu.core_type = #tpu.core_type<tc>, window_params = [{transform_indices = @transform_0, window_bounds = array<i64: 1, 1, 64, 128>}, {pipeline_mode = #tpu.pipeline_mode<synchronous>, transform_indices = @transform_1, window_bounds = array<i64: 1, 128>}, {pipeline_mode = #tpu.pipeline_mode<synchronous>, transform_indices = @transform_2, window_bounds = array<i64: 1, 128>}, {transform_indices = @transform_3, window_bounds = array<i64: 1, 1, 64, 128>}]} {
    %c0 = arith.constant 0 : index
    %c0_0 = arith.constant 0 : index
    %c0_1 = arith.constant 0 : index
    %c0_2 = arith.constant 0 : index
    %0 = vector.load %arg2[%c0, %c0_0, %c0_1, %c0_2] : memref<1x1x64x128xf32, #tpu.memory_space<vmem>>, vector<1x1x64x128xf32>
    %1 = vector.shape_cast %0 : vector<1x1x64x128xf32> to vector<64x128xf32>
    %c0_3 = arith.constant 0 : index
    %c0_4 = arith.constant 0 : index
    %2 = vector.load %arg3[%c0_3, %c0_4] : memref<1x128xf32, #tpu.memory_space<vmem>>, vector<1x128xf32>
    %3 = vector.broadcast %2 : vector<1x128xf32> to vector<64x128xf32>
    %4 = arith.mulf %1, %3 : vector<64x128xf32>
    %c0_5 = arith.constant 0 : index
    %c0_6 = arith.constant 0 : index
    %5 = vector.load %arg4[%c0_5, %c0_6] : memref<1x128xf32, #tpu.memory_space<vmem>>, vector<1x128xf32>
    %6 = vector.broadcast %5 : vector<1x128xf32> to vector<64x128xf32>
    %7 = arith.addf %4, %6 : vector<64x128xf32>
    %cst = arith.constant 0.000000e+00 : f32
    %8 = vector.broadcast %cst : f32 to vector<64x128xf32>
    %9 = arith.maximumf %7, %8 : vector<64x128xf32>
    %c0_7 = arith.constant 0 : index
    %c0_8 = arith.constant 0 : index
    %c0_9 = arith.constant 0 : index
    %c0_10 = arith.constant 0 : index
    %10 = vector.load %arg5[%c0_7, %c0_8, %c0_9, %c0_10] : memref<1x1x64x128xf32, #tpu.memory_space<vmem>>, vector<1x1x64x128xf32>
    %11 = vector.shape_cast %10 : vector<1x1x64x128xf32> to vector<64x128xf32>
    %12 = vector.shape_cast %9 : vector<64x128xf32> to vector<1x1x64x128xf32>
    tpu.vector_store %arg5[%c0_7, %c0_8, %c0_9, %c0_10], %12 {strides = array<i32>} : memref<1x1x64x128xf32, #tpu.memory_space<vmem>>, vector<1x1x64x128xf32>,
    return
  }
  func.func @transform_0(%arg0: i32, %arg1: i32) -> (i32, i32, i32, i32) {
    %c0_i32 = arith.constant 0 : i32
    %c0_i32_0 = arith.constant 0 : i32
    %c0_i32_1 = arith.constant 0 : i32
    return %arg0, %arg1, %c0_i32, %c0_i32_0 : i32, i32, i32, i32
  }
  func.func @transform_1(%arg0: i32, %arg1: i32) -> (i32, i32) {
    %c0_i32 = arith.constant 0 : i32
    %c0_i32_0 = arith.constant 0 : i32
    %c0_i32_1 = arith.constant 0 : i32
    return %c0_i32, %c0_i32_0 : i32, i32
  }
  func.func @transform_2(%arg0: i32, %arg1: i32) -> (i32, i32) {
    %c0_i32 = arith.constant 0 : i32
    %c0_i32_0 = arith.constant 0 : i32
    %c0_i32_1 = arith.constant 0 : i32
    return %c0_i32, %c0_i32_0 : i32, i32
  }
  func.func @transform_3(%arg0: i32, %arg1: i32) -> (i32, i32, i32, i32) {
    %c0_i32 = arith.constant 0 : i32
    %c0_i32_0 = arith.constant 0 : i32
    %c0_i32_1 = arith.constant 0 : i32
    return %arg0, %arg1, %c0_i32, %c0_i32_0 : i32, i32, i32, i32
  }
}

</mosaic_0001>

<llo_original>
// kernel: conv_bn_relu_3d.3
$region0: #{conv_bn_relu_3d.3}
  #allocation0 [shape = 'u32[]', space=smem, size = 0x4, offset = 0x4, fixed_abs, tag = 'smem constant byte address 0x4 - core index']
  #allocation1 [shape = 'u32[72,128]{1,0:T(1,128)}', space=vmem, size = 0x9000, scoped, tag = 'internal scratch']
  %s0 = inlined_call_operand.vmem [shape: f32[2,8,64,128], index: 0, kind: input, shape index: {}, may-alias: {0,3}]
  %s1 = inlined_call_operand.vmem [shape: f32[1,128], index: 1, kind: input, shape index: {}]
  %s2 = inlined_call_operand.vmem [shape: f32[1,128], index: 2, kind: input, shape index: {}]
  %s3 = inlined_call_operand.vmem [shape: f32[2,8,64,128], index: 3, kind: output, shape index: {}, may-alias: {0,3}]
  %s4 = sld [smem:[#allocation0]]
  $region45: #{conv_bn_relu_3d.3} parent=0
    _
  %s6 = ssub.s32 1, %s4
  %s7 = scalar_select 0, %s6, %s4
  loop: start=0, step=1, limit=18
  $region2: #{conv_bn_relu_3d.3} parent=0 // loop_pre_header
    _
  $region3: #{conv_bn_relu_3d.3} parent=0 // loop_header
    %s9 = sphi 0, %s13
    %p10 = scmp.ge.s32.totalorder %s9, 18
    %s16 = sphi 0, %s28
    %s17 = sphi 0, %s24
    %s18 = sphi 0, %s16
    %s19 = sphi 0, %s17
    %s20 = sphi 0, %s18
    %s21 = sphi 0, %s19
    %s33 = sphi 0, %s35
    %s36 = sphi 0, %s33
    %s37 = sphi 0, %s36
    %s53 = sphi 0, %s37
    %s57 = sphi 0, %s57
    %s59 = sphi 0, %s57
    %s60 = sphi 0, %s59
    %s74 = sphi 0, %s60
    %s78 = sphi 0, %s78
    %s80 = sphi 0, %s78
    %s81 = sphi 0, %s80
    %s95 = sphi 0, %s81
    %s103 = sphi 0, %s105
    %s106 = sphi 0, %s103
    %s107 = sphi 0, %s106
    %s123 = sphi 0, %s107
  $region4: #{conv_bn_relu_3d.3} parent=0 // loop_header_branch
    %12 = sbr.rel (%p10) target = $region8
  $region5: #{conv_bn_relu_3d.3} parent=0 // loop_body
    %s14 = ssub.s32 %s9, 1
    %s15 = ssub.s32 %s9, 2
    %s22 = sadd.s32 1, %s17
    %p23 = scmp.ge.s32.totalorder %s22, 8
    %s24 = scalar_select %p23, 0, %s22
    %s25 = sadd.s32 1, %s16
    %s26 = scalar_select %p23, %s25, %s16
    %p27 = scmp.ge.s32.totalorder %s26, 2
    %s28 = scalar_select %p27, 0, %s26
    %s29 = ssub.s32 %s16, %s28
    %s30 = ssub.s32 %s17, %s24
    %s31 = sor.u32 %s29, %s30
    %p32 = scmp.eq.s32.totalorder %s31, 0
    %s34 = sadd.s32 %s33, 1
    %s35 = scalar_select %p32, %s33, %s34
    %p38 = pneg %p32
    %p39 = scmp.eq.s32.totalorder %s9, 15
    %p40 = por %p38, %p39
    %p41 = scmp.ne.s32.totalorder %s33, %s36
    %p42 = scmp.eq.s32.totalorder %s9, 0
    %p43 = por %p41, %p42
    %p44 = scmp.ne.s32.totalorder %s33, %s36
    %p45 = scmp.eq.s32.totalorder %s14, 15
    %p46 = por %p44, %p45
    %p47 = scmp.ne.s32.totalorder %s36, %s37
    %p48 = scmp.eq.s32.totalorder %s14, 0
    %p49 = por %p47, %p48
    %p50 = scmp.ne.s32.totalorder %s36, %s37
    %p51 = scmp.eq.s32.totalorder %s15, 15
    %p52 = por %p50, %p51
    %p54 = scmp.ne.s32.totalorder %s37, %s53
    %p55 = scmp.eq.s32.totalorder %s15, 0
    %p56 = por %p54, %p55
    %s58 = sadd.s32 %s57, 1
    %p61 = scmp.eq.s32.totalorder %s9, 15
    %p62 = scmp.ne.s32.totalorder %s57, %s59
    %p63 = scmp.eq.s32.totalorder %s9, 0
    %p64 = por %p62, %p63
    %p65 = scmp.ne.s32.totalorder %s57, %s59
    %p66 = scmp.eq.s32.totalorder %s14, 15
    %p67 = por %p65, %p66
    %p68 = scmp.ne.s32.totalorder %s59, %s60
    %p69 = scmp.eq.s32.totalorder %s14, 0
    %p70 = por %p68, %p69
    %p71 = scmp.ne.s32.totalorder %s59, %s60
    %p72 = scmp.eq.s32.totalorder %s15, 15
    %p73 = por %p71, %p72
    %p75 = scmp.ne.s32.totalorder %s60, %s74
    %p76 = scmp.eq.s32.totalorder %s15, 0
    %p77 = por %p75, %p76
    %s79 = sadd.s32 %s78, 1
    %p82 = scmp.eq.s32.totalorder %s9, 15
    %p83 = scmp.ne.s32.totalorder %s78, %s80
    %p84 = scmp.eq.s32.totalorder %s9, 0
    %p85 = por %p83, %p84
    %p86 = scmp.ne.s32.totalorder %s78, %s80
    %p87 = scmp.eq.s32.totalorder %s14, 15
    %p88 = por %p86, %p87
    %p89 = scmp.ne.s32.totalorder %s80, %s81
    %p90 = scmp.eq.s32.totalorder %s14, 0
    %p91 = por %p89, %p90
    %p92 = scmp.ne.s32.totalorder %s80, %s81
    %p93 = scmp.eq.s32.totalorder %s15, 15
    %p94 = por %p92, %p93
    %p96 = scmp.ne.s32.totalorder %s81, %s95
    %p97 = scmp.eq.s32.totalorder %s15, 0
    %p98 = por %p96, %p97
    %s99 = ssub.s32 %s16, %s28
    %s100 = ssub.s32 %s17, %s24
    %s101 = sor.u32 %s99, %s100
    %p102 = scmp.eq.s32.totalorder %s101, 0
    %s104 = sadd.s32 %s103, 1
    %s105 = scalar_select %p102, %s103, %s104
    %p108 = pneg %p102
    %p109 = scmp.eq.s32.totalorder %s9, 15
    %p110 = por %p108, %p109
    %p111 = scmp.ne.s32.totalorder %s103, %s106
    %p112 = scmp.eq.s32.totalorder %s9, 0
    %p113 = por %p111, %p112
    %p114 = scmp.ne.s32.totalorder %s103, %s106
    %p115 = scmp.eq.s32.totalorder %s14, 15
    %p116 = por %p114, %p115
    %p117 = scmp.ne.s32.totalorder %s106, %s107
    %p118 = scmp.eq.s32.totalorder %s14, 0
    %p119 = por %p117, %p118
    %p120 = scmp.ne.s32.totalorder %s106, %s107
    %p121 = scmp.eq.s32.totalorder %s15, 15
    %p122 = por %p120, %p121
    %p124 = scmp.ne.s32.totalorder %s107, %s123
    %p125 = scmp.eq.s32.totalorder %s15, 0
    %p126 = por %p124, %p125
    %p127 = scmp.le.s32.totalorder 1, %s9
    %p128 = scmp.lt.s32.totalorder %s9, 17
    %p129 = pnand %p127, %p128
    %p130 = pneg %p129
    // Predicated region
    $region9: #{conv_bn_relu_3d.3} parent=5 // pred_check
      _
    $region10: #{conv_bn_relu_3d.3} parent=5 // pred_check_branch
      %132 = sbr.rel (%p129) target = $region12
    $region11: #{conv_bn_relu_3d.3} parent=5 // pred_region
      %s133 = ssub.s32 %s9, 1
      // Predicated region
      $region13: #{conv_bn_relu_3d.3} parent=11 // pred_check
        %p134 = pneg %p70
      $region14: #{conv_bn_relu_3d.3} parent=11 // pred_check_branch
        %136 = sbr.rel (%p134) target = $region16
      $region15: #{conv_bn_relu_3d.3} parent=11 // pred_region
        _
      $region16: #{conv_bn_relu_3d.3} parent=11 // pred_fallthru
        _
      // Predicated region
      $region17: #{conv_bn_relu_3d.3} parent=11 // pred_check
        %p137 = pneg %p91
      $region18: #{conv_bn_relu_3d.3} parent=11 // pred_check_branch
        %139 = sbr.rel (%p137) target = $region20
      $region19: #{conv_bn_relu_3d.3} parent=11 // pred_region
        _
      $region20: #{conv_bn_relu_3d.3} parent=11 // pred_fallthru
        _
    $region12: #{conv_bn_relu_3d.3} parent=5 // pred_fallthru
      _
    %p140 = scmp.lt.s32.totalorder %s9, 16
    // Predicated region
    $region21: #{conv_bn_relu_3d.3} parent=5 // pred_check
      %p141 = pneg %p140
    $region22: #{conv_bn_relu_3d.3} parent=5 // pred_check_branch
      %143 = sbr.rel (%p141) target = $region24
    $region23: #{conv_bn_relu_3d.3} parent=5 // pred_region
      // Predicated region
      $region25: #{conv_bn_relu_3d.3} parent=23 // pred_check
        %p144 = pneg %p43
      $region26: #{conv_bn_relu_3d.3} parent=23 // pred_check_branch
        %146 = sbr.rel (%p144) target = $region28
      $region27: #{conv_bn_relu_3d.3} parent=23 // pred_region
        %p147 = scmp.lt.s32.totalorder %s16, 1
        %s148 = scalar_select %p147, %s16, 1
        %p149 = scmp.lt.s32.totalorder %s17, 7
        %s150 = scalar_select %p149, %s17, 7
        %s151 = smul.addr %s150, 8
        %s152 = smul.addr %s148, 64
        %s153 = sadd.s32 %s151, %s152
        %s154 = smul.addr %s153, 8
        %s155 = scalar_lea.vmem %s0, %s154
      $region28: #{conv_bn_relu_3d.3} parent=23 // pred_fallthru
        _
    $region24: #{conv_bn_relu_3d.3} parent=5 // pred_fallthru
      _
    %p156 = scmp.le.s32.totalorder 1, %s9
    %p157 = scmp.lt.s32.totalorder %s9, 17
    %p158 = pnand %p156, %p157
    %p159 = pneg %p158
    // Predicated region
    $region29: #{conv_bn_relu_3d.3} parent=5 // pred_check
      _
    $region30: #{conv_bn_relu_3d.3} parent=5 // pred_check_branch
      %161 = sbr.rel (%p158) target = $region32
    $region31: #{conv_bn_relu_3d.3} parent=5 // pred_region
      %s162 = ssub.s32 %s9, 1
      %p163 = scmp.lt.s32.totalorder %s18, 1
      %s164 = scalar_select %p163, %s18, 1
      %p165 = scmp.lt.s32.totalorder %s19, 7
      %s166 = scalar_select %p165, %s19, 7
      %s167 = smul.addr %s166, 8
      %s168 = smul.addr %s164, 64
      %s169 = sadd.s32 %s167, %s168
      %s170 = smul.addr %s169, 8
      %s171 = scalar_lea.vmem %s0, %s170
      %p172 = pneg %p49
      %p173 = pneg %p46
      %p174 = pneg %p70
      %p175 = pneg %p67
      %p176 = pneg %p91
      %p177 = pneg %p88
      %p178 = pneg %p119
      %p179 = pneg %p116
      %p180 = scmp.lt.s32.totalorder %s18, 1
      %s181 = scalar_select %p180, %s18, 1
      %p182 = scmp.lt.s32.totalorder %s19, 7
      %s183 = scalar_select %p182, %s19, 7
      %s184 = smul.addr %s183, 8
      %s185 = smul.addr %s181, 64
      %s186 = sadd.s32 %s184, %s185
      %s187 = smul.addr %s186, 8
      %s188 = scalar_lea.vmem %s3, %s187
      %p189 = scmp.lt.s32.totalorder %s18, 1
      %s190 = scalar_select %p189, %s18, 1
      %p191 = scmp.lt.s32.totalorder %s19, 7
      %s192 = scalar_select %p191, %s19, 7
      %s193 = smul.addr %s192, 8
      %s194 = smul.addr %s190, 64
      %s195 = sadd.s32 %s193, %s194
      %s196 = smul.addr %s195, 8
      %s197 = scalar_lea.vmem %s0, %s196
      %p198 = scmp.lt.s32.totalorder %s18, 1
      %s199 = scalar_select %p198, %s18, 1
      %p200 = scmp.lt.s32.totalorder %s19, 7
      %s201 = scalar_select %p200, %s19, 7
      %s202 = smul.addr %s201, 8
      %s203 = smul.addr %s199, 64
      %s204 = sadd.s32 %s202, %s203
      %s205 = smul.addr %s204, 8
      %s206 = scalar_lea.vmem %s3, %s205
      %v207 = vld [vmem:[%s197] sm:$0xff]
      %v208 = vld [vmem:[%s197 + $0x8] sm:$0xff]
      %v209 = vld [vmem:[%s197 + $0x10] sm:$0xff]
      %v210 = vld [vmem:[%s197 + $0x18] sm:$0xff]
      %v211 = vld [vmem:[%s197 + $0x20] sm:$0xff]
      %v212 = vld [vmem:[%s197 + $0x28] sm:$0xff]
      %v213 = vld [vmem:[%s197 + $0x30] sm:$0xff]
      %v214 = vld [vmem:[%s197 + $0x38] sm:$0xff]
      %v215 = vld [vmem:[%s1] sm:$0x1]
      %v217 = vperm.slane %v215, 0
      %v219 = vmul.f32 %v207, %v217
      %v220 = vmul.f32 %v208, %v217
      %v221 = vmul.f32 %v209, %v217
      %v222 = vmul.f32 %v210, %v217
      %v223 = vmul.f32 %v211, %v217
      %v224 = vmul.f32 %v212, %v217
      %v225 = vmul.f32 %v213, %v217
      %v226 = vmul.f32 %v214, %v217
      %v227 = vld [vmem:[%s2] sm:$0x1]
      %v229 = vperm.slane %v227, 0
      %v231 = vadd.f32 %v219, %v229
      %v232 = vadd.f32 %v220, %v229
      %v233 = vadd.f32 %v221, %v229
      %v234 = vadd.f32 %v222, %v229
      %v235 = vadd.f32 %v223, %v229
      %v236 = vadd.f32 %v224, %v229
      %v237 = vadd.f32 %v225, %v229
      %v238 = vadd.f32 %v226, %v229
      %v239 = vmax.f32 %v231, 0.0
      %v240 = vmax.f32 %v232, 0.0
      %v241 = vmax.f32 %v233, 0.0
      %v242 = vmax.f32 %v234, 0.0
      %v243 = vmax.f32 %v235, 0.0
      %v244 = vmax.f32 %v236, 0.0
      %v245 = vmax.f32 %v237, 0.0
      %v246 = vmax.f32 %v238, 0.0
      %247 = vst [vmem:[%s206] sm:$0xff] %v239
      %248 = vst [vmem:[%s206 + $0x8] sm:$0xff] %v240
      %249 = vst [vmem:[%s206 + $0x10] sm:$0xff] %v241
      %250 = vst [vmem:[%s206 + $0x18] sm:$0xff] %v242
      %251 = vst [vmem:[%s206 + $0x20] sm:$0xff] %v243
      %252 = vst [vmem:[%s206 + $0x28] sm:$0xff] %v244
      %253 = vst [vmem:[%s206 + $0x30] sm:$0xff] %v245
      %254 = vst [vmem:[%s206 + $0x38] sm:$0xff] %v246
      %p255 = scmp.lt.s32.totalorder %s18, 1
      %s256 = scalar_select %p255, %s18, 1
      %p257 = scmp.lt.s32.totalorder %s19, 7
      %s258 = scalar_select %p257, %s19, 7
      %s259 = smul.addr %s258, 8
      %s260 = smul.addr %s256, 64
      %s261 = sadd.s32 %s259, %s260
      %s262 = smul.addr %s261, 8
      %s263 = scalar_lea.vmem %s3, %s262
      // Predicated region
      $region33: #{conv_bn_relu_3d.3} parent=31 // pred_check
        %p264 = pneg %p116
      $region34: #{conv_bn_relu_3d.3} parent=31 // pred_check_branch
        %266 = sbr.rel (%p264) target = $region36
      $region35: #{conv_bn_relu_3d.3} parent=31 // pred_region
        _
      $region36: #{conv_bn_relu_3d.3} parent=31 // pred_fallthru
        _
    $region32: #{conv_bn_relu_3d.3} parent=5 // pred_fallthru
      _
    %p267 = scmp.le.s32.totalorder 2, %s9
    // Predicated region
    $region37: #{conv_bn_relu_3d.3} parent=5 // pred_check
      %p268 = pneg %p267
    $region38: #{conv_bn_relu_3d.3} parent=5 // pred_check_branch
      %270 = sbr.rel (%p268) target = $region40
    $region39: #{conv_bn_relu_3d.3} parent=5 // pred_region
      %s271 = ssub.s32 %s9, 2
      // Predicated region
      $region41: #{conv_bn_relu_3d.3} parent=39 // pred_check
        %p272 = pneg %p122
      $region42: #{conv_bn_relu_3d.3} parent=39 // pred_check_branch
        %274 = sbr.rel (%p272) target = $region44
      $region43: #{conv_bn_relu_3d.3} parent=39 // pred_region
        %p275 = scmp.lt.s32.totalorder %s20, 1
        %s276 = scalar_select %p275, %s20, 1
        %p277 = scmp.lt.s32.totalorder %s21, 7
        %s278 = scalar_select %p277, %s21, 7
        %s279 = smul.addr %s278, 8
        %s280 = smul.addr %s276, 64
        %s281 = sadd.s32 %s279, %s280
        %s282 = smul.addr %s281, 8
        %s283 = scalar_lea.vmem %s3, %s282
      $region44: #{conv_bn_relu_3d.3} parent=39 // pred_fallthru
        _
    $region40: #{conv_bn_relu_3d.3} parent=5 // pred_fallthru
      _
  $region6: #{conv_bn_relu_3d.3} parent=0 // loop_footer
    %s13 = sadd.s32 1, %s9
  $region7: #{conv_bn_relu_3d.3} parent=0 // loop_footer_branch
    %8 = sbr.rel target = $region3
  $region8: #{conv_bn_relu_3d.3} parent=0 // loop_exit
    _

// kernel: conv_bn_relu_3d.2
$region0: #{conv_bn_relu_3d.2}
  #allocation0 [shape = 'u32[]', space=smem, size = 0x4, offset = 0x4, fixed_abs, tag = 'smem constant byte address 0x4 - core index']
  #allocation1 [shape = 'u32[72,128]{1,0:T(1,128)}', space=vmem, size = 0x9000, scoped, tag = 'internal scratch']
  %s0 = inlined_call_operand.vmem [shape: bf16[2,10,10,10,4], index: 0, kind: input, shape index: {}, may-alias: {0,1,2}]
  %s1 = inlined_call_operand.vmem [shape: bf16[2,10,10,10,4], index: 1, kind: input, shape index: {}, may-alias: {0,1,2}]
  %s2 = inlined_call_operand.vmem [shape: bf16[2,10,10,10,4], index: 2, kind: input, shape index: {}, may-alias: {0,1,2}]
  %s3 = inlined_call_operand.vmem [shape: bf16[27,4,128], index: 3, kind: input, shape index: {}]
  %s4 = inlined_call_operand.vmem [shape: f32[2,8,64,128], index: 4, kind: output, shape index: {0}]
  %s5 = inlined_call_operand.vmem [shape: f32[1,128], index: 5, kind: output, shape index: {1}]
  %s6 = inlined_call_operand.vmem [shape: f32[1,128], index: 6, kind: output, shape index: {2}]
  %7 = xla_tuple %s4, %s5, %s6
  %s8 = sld [smem:[#allocation0]]
  $region69: #{conv_bn_relu_3d.2} parent=0
    _
  %s10 = ssub.s32 1, %s8
  %s11 = scalar_select 0, %s10, %s8
  loop: start=0, step=1, limit=18
  $region2: #{conv_bn_relu_3d.2} parent=0 // loop_pre_header
    _
  $region3: #{conv_bn_relu_3d.2} parent=0 // loop_header
    %s13 = sphi 0, %s17
    %p14 = scmp.ge.s32.totalorder %s13, 18
    %s20 = sphi 0, %s32
    %s21 = sphi 0, %s28
    %s22 = sphi 0, %s20
    %s23 = sphi 0, %s21
    %s24 = sphi 0, %s22
    %s25 = sphi 0, %s23
    %s37 = sphi 0, %s39
    %s40 = sphi 0, %s37
    %s41 = sphi 0, %s40
    %s57 = sphi 0, %s41
    %s67 = sphi 0, %s69
    %s70 = sphi 0, %s67
    %s71 = sphi 0, %s70
    %s87 = sphi 0, %s71
    %s97 = sphi 0, %s99
    %s100 = sphi 0, %s97
    %s101 = sphi 0, %s100
    %s117 = sphi 0, %s101
    %s121 = sphi 0, %s121
    %s123 = sphi 0, %s121
    %s124 = sphi 0, %s123
    %s138 = sphi 0, %s124
    %s146 = sphi 0, %s148
    %s149 = sphi 0, %s146
    %s150 = sphi 0, %s149
    %s166 = sphi 0, %s150
    %s170 = sphi 0, %s170
    %s172 = sphi 0, %s170
    %s173 = sphi 0, %s172
    %s187 = sphi 0, %s173
    %s191 = sphi 0, %s191
    %s193 = sphi 0, %s191
    %s194 = sphi 0, %s193
    %s208 = sphi 0, %s194
  $region4: #{conv_bn_relu_3d.2} parent=0 // loop_header_branch
    %16 = sbr.rel (%p14) target = $region8
  $region5: #{conv_bn_relu_3d.2} parent=0 // loop_body
    %s18 = ssub.s32 %s13, 1
    %s19 = ssub.s32 %s13, 2
    %s26 = sadd.s32 1, %s21
    %p27 = scmp.ge.s32.totalorder %s26, 8
    %s28 = scalar_select %p27, 0, %s26
    %s29 = sadd.s32 1, %s20
    %s30 = scalar_select %p27, %s29, %s20
    %p31 = scmp.ge.s32.totalorder %s30, 2
    %s32 = scalar_select %p31, 0, %s30
    %s33 = ssub.s32 %s20, %s32
    %s34 = ssub.s32 %s21, %s28
    %s35 = sor.u32 %s33, %s34
    %p36 = scmp.eq.s32.totalorder %s35, 0
    %s38 = sadd.s32 %s37, 1
    %s39 = scalar_select %p36, %s37, %s38
    %p42 = pneg %p36
    %p43 = scmp.eq.s32.totalorder %s13, 15
    %p44 = por %p42, %p43
    %p45 = scmp.ne.s32.totalorder %s37, %s40
    %p46 = scmp.eq.s32.totalorder %s13, 0
    %p47 = por %p45, %p46
    %p48 = scmp.ne.s32.totalorder %s37, %s40
    %p49 = scmp.eq.s32.totalorder %s18, 15
    %p50 = por %p48, %p49
    %p51 = scmp.ne.s32.totalorder %s40, %s41
    %p52 = scmp.eq.s32.totalorder %s18, 0
    %p53 = por %p51, %p52
    %p54 = scmp.ne.s32.totalorder %s40, %s41
    %p55 = scmp.eq.s32.totalorder %s19, 15
    %p56 = por %p54, %p55
    %p58 = scmp.ne.s32.totalorder %s41, %s57
    %p59 = scmp.eq.s32.totalorder %s19, 0
    %p60 = por %p58, %p59
    %s61 = sadd.s32 %s21, 1
    %s62 = sadd.s32 %s28, 1
    %s63 = ssub.s32 %s20, %s32
    %s64 = ssub.s32 %s61, %s62
    %s65 = sor.u32 %s63, %s64
    %p66 = scmp.eq.s32.totalorder %s65, 0
    %s68 = sadd.s32 %s67, 1
    %s69 = scalar_select %p66, %s67, %s68
    %p72 = pneg %p66
    %p73 = scmp.eq.s32.totalorder %s13, 15
    %p74 = por %p72, %p73
    %p75 = scmp.ne.s32.totalorder %s67, %s70
    %p76 = scmp.eq.s32.totalorder %s13, 0
    %p77 = por %p75, %p76
    %p78 = scmp.ne.s32.totalorder %s67, %s70
    %p79 = scmp.eq.s32.totalorder %s18, 15
    %p80 = por %p78, %p79
    %p81 = scmp.ne.s32.totalorder %s70, %s71
    %p82 = scmp.eq.s32.totalorder %s18, 0
    %p83 = por %p81, %p82
    %p84 = scmp.ne.s32.totalorder %s70, %s71
    %p85 = scmp.eq.s32.totalorder %s19, 15
    %p86 = por %p84, %p85
    %p88 = scmp.ne.s32.totalorder %s71, %s87
    %p89 = scmp.eq.s32.totalorder %s19, 0
    %p90 = por %p88, %p89
    %s91 = sadd.s32 %s21, 2
    %s92 = sadd.s32 %s28, 2
    %s93 = ssub.s32 %s20, %s32
    %s94 = ssub.s32 %s91, %s92
    %s95 = sor.u32 %s93, %s94
    %p96 = scmp.eq.s32.totalorder %s95, 0
    %s98 = sadd.s32 %s97, 1
    %s99 = scalar_select %p96, %s97, %s98
    %p102 = pneg %p96
    %p103 = scmp.eq.s32.totalorder %s13, 15
    %p104 = por %p102, %p103
    %p105 = scmp.ne.s32.totalorder %s97, %s100
    %p106 = scmp.eq.s32.totalorder %s13, 0
    %p107 = por %p105, %p106
    %p108 = scmp.ne.s32.totalorder %s97, %s100
    %p109 = scmp.eq.s32.totalorder %s18, 15
    %p110 = por %p108, %p109
    %p111 = scmp.ne.s32.totalorder %s100, %s101
    %p112 = scmp.eq.s32.totalorder %s18, 0
    %p113 = por %p111, %p112
    %p114 = scmp.ne.s32.totalorder %s100, %s101
    %p115 = scmp.eq.s32.totalorder %s19, 15
    %p116 = por %p114, %p115
    %p118 = scmp.ne.s32.totalorder %s101, %s117
    %p119 = scmp.eq.s32.totalorder %s19, 0
    %p120 = por %p118, %p119
    %s122 = sadd.s32 %s121, 1
    %p125 = scmp.eq.s32.totalorder %s13, 15
    %p126 = scmp.ne.s32.totalorder %s121, %s123
    %p127 = scmp.eq.s32.totalorder %s13, 0
    %p128 = por %p126, %p127
    %p129 = scmp.ne.s32.totalorder %s121, %s123
    %p130 = scmp.eq.s32.totalorder %s18, 15
    %p131 = por %p129, %p130
    %p132 = scmp.ne.s32.totalorder %s123, %s124
    %p133 = scmp.eq.s32.totalorder %s18, 0
    %p134 = por %p132, %p133
    %p135 = scmp.ne.s32.totalorder %s123, %s124
    %p136 = scmp.eq.s32.totalorder %s19, 15
    %p137 = por %p135, %p136
    %p139 = scmp.ne.s32.totalorder %s124, %s138
    %p140 = scmp.eq.s32.totalorder %s19, 0
    %p141 = por %p139, %p140
    %s142 = ssub.s32 %s20, %s32
    %s143 = ssub.s32 %s21, %s28
    %s144 = sor.u32 %s142, %s143
    %p145 = scmp.eq.s32.totalorder %s144, 0
    %s147 = sadd.s32 %s146, 1
    %s148 = scalar_select %p145, %s146, %s147
    %p151 = pneg %p145
    %p152 = scmp.eq.s32.totalorder %s13, 15
    %p153 = por %p151, %p152
    %p154 = scmp.ne.s32.totalorder %s146, %s149
    %p155 = scmp.eq.s32.totalorder %s13, 0
    %p156 = por %p154, %p155
    %p157 = scmp.ne.s32.totalorder %s146, %s149
    %p158 = scmp.eq.s32.totalorder %s18, 15
    %p159 = por %p157, %p158
    %p160 = scmp.ne.s32.totalorder %s149, %s150
    %p161 = scmp.eq.s32.totalorder %s18, 0
    %p162 = por %p160, %p161
    %p163 = scmp.ne.s32.totalorder %s149, %s150
    %p164 = scmp.eq.s32.totalorder %s19, 15
    %p165 = por %p163, %p164
    %p167 = scmp.ne.s32.totalorder %s150, %s166
    %p168 = scmp.eq.s32.totalorder %s19, 0
    %p169 = por %p167, %p168
    %s171 = sadd.s32 %s170, 1
    %p174 = scmp.eq.s32.totalorder %s13, 15
    %p175 = scmp.ne.s32.totalorder %s170, %s172
    %p176 = scmp.eq.s32.totalorder %s13, 0
    %p177 = por %p175, %p176
    %p178 = scmp.ne.s32.totalorder %s170, %s172
    %p179 = scmp.eq.s32.totalorder %s18, 15
    %p180 = por %p178, %p179
    %p181 = scmp.ne.s32.totalorder %s172, %s173
    %p182 = scmp.eq.s32.totalorder %s18, 0
    %p183 = por %p181, %p182
    %p184 = scmp.ne.s32.totalorder %s172, %s173
    %p185 = scmp.eq.s32.totalorder %s19, 15
    %p186 = por %p184, %p185
    %p188 = scmp.ne.s32.totalorder %s173, %s187
    %p189 = scmp.eq.s32.totalorder %s19, 0
    %p190 = por %p188, %p189
    %s192 = sadd.s32 %s191, 1
    %p195 = scmp.eq.s32.totalorder %s13, 15
    %p196 = scmp.ne.s32.totalorder %s191, %s193
    %p197 = scmp.eq.s32.totalorder %s13, 0
    %p198 = por %p196, %p197
    %p199 = scmp.ne.s32.totalorder %s191, %s193
    %p200 = scmp.eq.s32.totalorder %s18, 15
    %p201 = por %p199, %p200
    %p202 = scmp.ne.s32.totalorder %s193, %s194
    %p203 = scmp.eq.s32.totalorder %s18, 0
    %p204 = por %p202, %p203
    %p205 = scmp.ne.s32.totalorder %s193, %s194
    %p206 = scmp.eq.s32.totalorder %s19, 15
    %p207 = por %p205, %p206
    %p209 = scmp.ne.s32.totalorder %s194, %s208
    %p210 = scmp.eq.s32.totalorder %s19, 0
    %p211 = por %p209, %p210
    %p212 = scmp.le.s32.totalorder 1, %s13
    %p213 = scmp.lt.s32.totalorder %s13, 17
    %p214 = pnand %p212, %p213
    %p215 = pneg %p214
    // Predicated region
    $region9: #{conv_bn_relu_3d.2} parent=5 // pred_check
      _
    $region10: #{conv_bn_relu_3d.2} parent=5 // pred_check_branch
      %217 = sbr.rel (%p214) target = $region12
    $region11: #{conv_bn_relu_3d.2} parent=5 // pred_region
      %s218 = ssub.s32 %s13, 1
      // Predicated region
      $region13: #{conv_bn_relu_3d.2} parent=11 // pred_check
        %p219 = pneg %p134
      $region14: #{conv_bn_relu_3d.2} parent=11 // pred_check_branch
        %221 = sbr.rel (%p219) target = $region16
      $region15: #{conv_bn_relu_3d.2} parent=11 // pred_region
        _
      $region16: #{conv_bn_relu_3d.2} parent=11 // pred_fallthru
        _
    $region12: #{conv_bn_relu_3d.2} parent=5 // pred_fallthru
      _
    %p222 = scmp.lt.s32.totalorder %s13, 16
    // Predicated region
    $region17: #{conv_bn_relu_3d.2} parent=5 // pred_check
      %p223 = pneg %p222
    $region18: #{conv_bn_relu_3d.2} parent=5 // pred_check_branch
      %225 = sbr.rel (%p223) target = $region20
    $region19: #{conv_bn_relu_3d.2} parent=5 // pred_region
      // Predicated region
      $region21: #{conv_bn_relu_3d.2} parent=19 // pred_check
        %p226 = pneg %p47
      $region22: #{conv_bn_relu_3d.2} parent=19 // pred_check_branch
        %228 = sbr.rel (%p226) target = $region24
      $region23: #{conv_bn_relu_3d.2} parent=19 // pred_region
        %p229 = scmp.lt.s32.totalorder %s20, 1
        %s230 = scalar_select %p229, %s20, 1
        %p231 = scmp.lt.s32.totalorder %s21, 9
        %s232 = scalar_select %p231, %s21, 9
        %s233 = smul.addr %s232, 20
        %s234 = smul.addr %s230, 200
        %s235 = sadd.s32 %s233, %s234
        %s236 = smul.addr %s235, 4
        %s237 = scalar_lea.vmem %s0, %s236
      $region24: #{conv_bn_relu_3d.2} parent=19 // pred_fallthru
        _
      // Predicated region
      $region25: #{conv_bn_relu_3d.2} parent=19 // pred_check
        %p238 = pneg %p77
      $region26: #{conv_bn_relu_3d.2} parent=19 // pred_check_branch
        %240 = sbr.rel (%p238) target = $region28
      $region27: #{conv_bn_relu_3d.2} parent=19 // pred_region
        %s241 = sadd.s32 %s21, 1
        %p242 = scmp.lt.s32.totalorder %s20, 1
        %s243 = scalar_select %p242, %s20, 1
        %p244 = scmp.lt.s32.totalorder %s241, 9
        %s245 = scalar_select %p244, %s241, 9
        %s246 = smul.addr %s245, 20
        %s247 = smul.addr %s243, 200
        %s248 = sadd.s32 %s246, %s247
        %s249 = smul.addr %s248, 4
        %s250 = scalar_lea.vmem %s1, %s249
        %s251 = sadd.s32 %s21, 1
      $region28: #{conv_bn_relu_3d.2} parent=19 // pred_fallthru
        _
      // Predicated region
      $region29: #{conv_bn_relu_3d.2} parent=19 // pred_check
        %p252 = pneg %p107
      $region30: #{conv_bn_relu_3d.2} parent=19 // pred_check_branch
        %254 = sbr.rel (%p252) target = $region32
      $region31: #{conv_bn_relu_3d.2} parent=19 // pred_region
        %s255 = sadd.s32 %s21, 2
        %p256 = scmp.lt.s32.totalorder %s20, 1
        %s257 = scalar_select %p256, %s20, 1
        %p258 = scmp.lt.s32.totalorder %s255, 9
        %s259 = scalar_select %p258, %s255, 9
        %s260 = smul.addr %s259, 20
        %s261 = smul.addr %s257, 200
        %s262 = sadd.s32 %s260, %s261
        %s263 = smul.addr %s262, 4
        %s264 = scalar_lea.vmem %s2, %s263
        %s265 = sadd.s32 %s21, 2
      $region32: #{conv_bn_relu_3d.2} parent=19 // pred_fallthru
        _
    $region20: #{conv_bn_relu_3d.2} parent=5 // pred_fallthru
      _
    %p266 = scmp.le.s32.totalorder 1, %s13
    %p267 = scmp.lt.s32.totalorder %s13, 17
    %p268 = pnand %p266, %p267
    %p269 = pneg %p268
    // Predicated region
    $region33: #{conv_bn_relu_3d.2} parent=5 // pred_check
      _
    $region34: #{conv_bn_relu_3d.2} parent=5 // pred_check_branch
      %271 = sbr.rel (%p268) target = $region36
    $region35: #{conv_bn_relu_3d.2} parent=5 // pred_region
      %s272 = ssub.s32 %s13, 1
      %p273 = scmp.lt.s32.totalorder %s22, 1
      %s274 = scalar_select %p273, %s22, 1
      %p275 = scmp.lt.s32.totalorder %s23, 9
      %s276 = scalar_select %p275, %s23, 9
      %s277 = smul.addr %s276, 20
      %s278 = smul.addr %s274, 200
      %s279 = sadd.s32 %s277, %s278
      %s280 = smul.addr %s279, 4
      %s281 = scalar_lea.vmem %s0, %s280
      %p282 = pneg %p53
      %p283 = pneg %p50
      %s284 = sadd.s32 %s23, 1
      %p285 = scmp.lt.s32.totalorder %s22, 1
      %s286 = scalar_select %p285, %s22, 1
      %p287 = scmp.lt.s32.totalorder %s284, 9
      %s288 = scalar_select %p287, %s284, 9
      %s289 = smul.addr %s288, 20
      %s290 = smul.addr %s286, 200
      %s291 = sadd.s32 %s289, %s290
      %s292 = smul.addr %s291, 4
      %s293 = scalar_lea.vmem %s1, %s292
      %p294 = pneg %p83
      %p295 = pneg %p80
      %s296 = sadd.s32 %s23, 2
      %p297 = scmp.lt.s32.totalorder %s22, 1
      %s298 = scalar_select %p297, %s22, 1
      %p299 = scmp.lt.s32.totalorder %s296, 9
      %s300 = scalar_select %p299, %s296, 9
      %s301 = smul.addr %s300, 20
      %s302 = smul.addr %s298, 200
      %s303 = sadd.s32 %s301, %s302
      %s304 = smul.addr %s303, 4
      %s305 = scalar_lea.vmem %s2, %s304
      %p306 = pneg %p113
      %p307 = pneg %p110
      %p308 = pneg %p134
      %p309 = pneg %p131
      %p310 = pneg %p162
      %p311 = pneg %p159
      %p312 = scmp.lt.s32.totalorder %s22, 1
      %s313 = scalar_select %p312, %s22, 1
      %p314 = scmp.lt.s32.totalorder %s23, 7
      %s315 = scalar_select %p314, %s23, 7
      %s316 = smul.addr %s315, 8
      %s317 = smul.addr %s313, 64
      %s318 = sadd.s32 %s316, %s317
      %s319 = smul.addr %s318, 8
      %s320 = scalar_lea.vmem %s4, %s319
      %p321 = pneg %p183
      %p322 = pneg %p180
      %p323 = pneg %p204
      %p324 = pneg %p201
      %p325 = scmp.lt.s32.totalorder %s22, 1
      %s326 = scalar_select %p325, %s22, 1
      %p327 = scmp.lt.s32.totalorder %s23, 9
      %s328 = scalar_select %p327, %s23, 9
      %s329 = smul.addr %s328, 20
      %s330 = smul.addr %s326, 200
      %s331 = sadd.s32 %s329, %s330
      %s332 = smul.addr %s331, 4
      %s333 = scalar_lea.vmem %s0, %s332
      %s334 = sadd.s32 %s23, 1
      %p335 = scmp.lt.s32.totalorder %s22, 1
      %s336 = scalar_select %p335, %s22, 1
      %p337 = scmp.lt.s32.totalorder %s334, 9
      %s338 = scalar_select %p337, %s334, 9
      %s339 = smul.addr %s338, 20
      %s340 = smul.addr %s336, 200
      %s341 = sadd.s32 %s339, %s340
      %s342 = smul.addr %s341, 4
      %s343 = scalar_lea.vmem %s1, %s342
      %s344 = sadd.s32 %s23, 1
      %s345 = sadd.s32 %s23, 2
      %p346 = scmp.lt.s32.totalorder %s22, 1
      %s347 = scalar_select %p346, %s22, 1
      %p348 = scmp.lt.s32.totalorder %s345, 9
      %s349 = scalar_select %p348, %s345, 9
      %s350 = smul.addr %s349, 20
      %s351 = smul.addr %s347, 200
      %s352 = sadd.s32 %s350, %s351
      %s353 = smul.addr %s352, 4
      %s354 = scalar_lea.vmem %s2, %s353
      %s355 = sadd.s32 %s23, 2
      %p356 = scmp.lt.s32.totalorder %s22, 1
      %s357 = scalar_select %p356, %s22, 1
      %p358 = scmp.lt.s32.totalorder %s23, 7
      %s359 = scalar_select %p358, %s23, 7
      %s360 = smul.addr %s359, 8
      %s361 = smul.addr %s357, 64
      %s362 = sadd.s32 %s360, %s361
      %s363 = smul.addr %s362, 8
      %s364 = scalar_lea.vmem %s4, %s363
      %s366 = smul.u32 %s22, 8
      %s367 = sadd.s32 %s366, %s23
      %p368 = scmp.eq.s32.totalorder %s367, 0
      // Predicated region
      $region37: #{conv_bn_relu_3d.2} parent=35 // pred_check
        %p369 = pneg %p368
      $region38: #{conv_bn_relu_3d.2} parent=35 // pred_check_branch
        %371 = sbr.rel (%p369) target = $region40
      $region39: #{conv_bn_relu_3d.2} parent=35 // pred_region
        %372 = vst [vmem:[%s5] sm:$0x1] 0.0
        %373 = vst [vmem:[%s6] sm:$0x1] 0.0
      $region40: #{conv_bn_relu_3d.2} parent=35 // pred_fallthru
        _
      %v374 = vld [vmem:[%s333] sm:$0xf]
      %v375 = vld [vmem:[%s333 + $0x4] sm:$0x1]
      %v376 = vld [vmem:[%s333 + $0x8] sm:$0xf]
      %v377 = vld [vmem:[%s333 + $0xc] sm:$0x1]
      %v378 = vld [vmem:[%s333 + $0x10] sm:$0xf]
      %v379 = vld [vmem:[%s333 + $0x14] sm:$0x1]
      %v380 = vld [vmem:[%s333 + $0x18] sm:$0xf]
      %v381 = vld [vmem:[%s333 + $0x1c] sm:$0x1]
      %v382 = vld [vmem:[%s333 + $0x20] sm:$0xf]
      %v383 = vld [vmem:[%s333 + $0x24] sm:$0x1]
      %v384 = vld [vmem:[%s333 + $0x28] sm:$0xf]
      %v385 = vld [vmem:[%s333 + $0x2c] sm:$0x1]
      %v386 = vld [vmem:[%s333 + $0x30] sm:$0xf]
      %v387 = vld [vmem:[%s333 + $0x34] sm:$0x1]
      %v388 = vld [vmem:[%s333 + $0x38] sm:$0xf]
      %v389 = vld [vmem:[%s333 + $0x3c] sm:$0x1]
      %v390 = vld [vmem:[%s333 + $0x40] sm:$0xf]
      %v391 = vld [vmem:[%s333 + $0x44] sm:$0x1]
      %v392 = vld [vmem:[%s333 + $0x48] sm:$0xf]
      %v393 = vld [vmem:[%s333 + $0x4c] sm:$0x1]
      %v394 = vunpack.c.l.bf16 %v374
      %v395 = vunpack.c.l.bf16 %v375
      %v396 = vunpack.c.l.bf16 %v376
      %v397 = vunpack.c.l.bf16 %v377
      %v398 = vunpack.c.l.bf16 %v378
      %v399 = vunpack.c.l.bf16 %v379
      %v400 = vunpack.c.l.bf16 %v380
      %v401 = vunpack.c.l.bf16 %v381
      %v402 = vunpack.c.l.bf16 %v382
      %v403 = vunpack.c.l.bf16 %v383
      %v404 = vunpack.c.l.bf16 %v384
      %v405 = vunpack.c.l.bf16 %v385
      %v406 = vunpack.c.l.bf16 %v386
      %v407 = vunpack.c.l.bf16 %v387
      %v408 = vunpack.c.l.bf16 %v388
      %v409 = vunpack.c.l.bf16 %v389
      %v410 = vunpack.c.l.bf16 %v390
      %v411 = vunpack.c.l.bf16 %v391
      %v412 = vunpack.c.l.bf16 %v392
      %v413 = vunpack.c.l.bf16 %v393
      %v414 = vpack.c.bf16 %v396, %v394
      %v415 = vpack.c.bf16 %v400, %v398
      %v416 = vpack.c.bf16 %v404, %v402
      %v417 = vpack.c.bf16 %v408, %v406
      %v418 = vld [vmem:[%s3] sm:$0x3]
      %vm435 = vcmask 1046528
      %v436 = vrot.slane %v394, 1
      %v437 = vrot.slane %v395, 1
      %v438 = vsel %vm435, %v436, %v437
      %v439 = vrot.slane %v396, 1
      %v440 = vrot.slane %v397, 1
      %v441 = vsel %vm435, %v439, %v440
      %v442 = vrot.slane %v398, 1
      %v443 = vrot.slane %v399, 1
      %v444 = vsel %vm435, %v442, %v443
      %v445 = vrot.slane %v400, 1
      %v446 = vrot.slane %v401, 1
      %v447 = vsel %vm435, %v445, %v446
      %v448 = vrot.slane %v402, 1
      %v449 = vrot.slane %v403, 1
      %v450 = vsel %vm435, %v448, %v449
      %v451 = vrot.slane %v404, 1
      %v452 = vrot.slane %v405, 1
      %v453 = vsel %vm435, %v451, %v452
      %v454 = vrot.slane %v406, 1
      %v455 = vrot.slane %v407, 1
      %v456 = vsel %vm435, %v454, %v455
      %v457 = vrot.slane %v408, 1
      %v458 = vrot.slane %v409, 1
      %v459 = vsel %vm435, %v457, %v458
      %v468 = vpack.c.bf16 %v441, %v438
      %v469 = vpack.c.bf16 %v447, %v444
      %v470 = vpack.c.bf16 %v453, %v450
      %v471 = vpack.c.bf16 %v459, %v456
      %s472 = scalar_lea.vmem %s3, 2
      %v473 = vld [vmem:[%s472] sm:$0x3]
      %vm474 = vcmask 31744
      %v476 = vsel %vm474, %v468, 0
      %v479 = vsel %vm474, %v469, 0
      %v482 = vsel %vm474, %v470, 0
      %v485 = vsel %vm474, %v471, 0
      %vm487 = vcmask 1041408
      %v489 = vsel %vm487, %v473, 0
      %491 = vmatpush.bf16.msra.mxu0 0
      %492 = vmatpush.bf16.msra.mxu0 0
      %493 = vmatpush.bf16.msra.mxu0 0
      %494 = vmatpush.bf16.msra.mxu0 0
      %495 = vmatpush.bf16.msra.mxu0 0
      %496 = vmatpush.bf16.msra.mxu0 0
      %497 = vmatpush.bf16.msra.mxu0 0
      %498 = vmatpush.bf16.msra.mxu0 %v489
      %499 = vmatmul.bf16.gmra.mxu0 %v476
      %v500 = vpop.f32.mrf.mxu0
      %v501 = vadd.f32 0.0, %v500
      %v502 = vpop.f32.mrf.mxu0
      %v503 = vadd.f32 0.0, %v502
      %504 = vmatmul.bf16.gmra.mxu0 %v479
      %v505 = vpop.f32.mrf.mxu0
      %v506 = vadd.f32 0.0, %v505
      %v507 = vpop.f32.mrf.mxu0
      %v508 = vadd.f32 0.0, %v507
      %509 = vmatmul.bf16.gmra.mxu0 %v482
      %v510 = vpop.f32.mrf.mxu0
      %v511 = vadd.f32 0.0, %v510
      %v512 = vpop.f32.mrf.mxu0
      %v513 = vadd.f32 0.0, %v512
      %514 = vmatmul.bf16.gmra.mxu0 %v485
      %v515 = vpop.f32.mrf.mxu0
      %v516 = vadd.f32 0.0, %v515
      %v517 = vpop.f32.mrf.mxu0
      %v518 = vadd.f32 0.0, %v517
      %519 = vdwg.mxu0
      %v521 = vsel %vm474, %v414, 0
      %v524 = vsel %vm474, %v415, 0
      %v527 = vsel %vm474, %v416, 0
      %v530 = vsel %vm474, %v417, 0
      %v533 = vsel %vm487, %v418, 0
      %535 = vmatpush.bf16.msra.mxu0 0
      %536 = vmatpush.bf16.msra.mxu0 0
      %537 = vmatpush.bf16.msra.mxu0 0
      %538 = vmatpush.bf16.msra.mxu0 0
      %539 = vmatpush.bf16.msra.mxu0 0
      %540 = vmatpush.bf16.msra.mxu0 0
      %541 = vmatpush.bf16.msra.mxu0 0
      %542 = vmatpush.bf16.msra.mxu0 %v533
      %543 = vmatmul.bf16.gmra.mxu0 %v521
      %v544 = vpop.f32.mrf.mxu0
      %v545 = vadd.f32 %v501, %v544
      %v546 = vpop.f32.mrf.mxu0
      %v547 = vadd.f32 %v503, %v546
      %548 = vmatmul.bf16.gmra.mxu0 %v524
      %v549 = vpop.f32.mrf.mxu0
      %v550 = vadd.f32 %v506, %v549
      %v551 = vpop.f32.mrf.mxu0
      %v552 = vadd.f32 %v508, %v551
      %553 = vmatmul.bf16.gmra.mxu0 %v527
      %v554 = vpop.f32.mrf.mxu0
      %v555 = vadd.f32 %v511, %v554
      %v556 = vpop.f32.mrf.mxu0
      %v557 = vadd.f32 %v513, %v556
      %558 = vmatmul.bf16.gmra.mxu0 %v530
      %v559 = vpop.f32.mrf.mxu0
      %v560 = vadd.f32 %v516, %v559
      %v561 = vpop.f32.mrf.mxu0
      %v562 = vadd.f32 %v518, %v561
      %563 = vdwg.mxu0
      %vm564 = vcmask 1045504
      %v565 = vrot.slane %v394, 2
      %v566 = vrot.slane %v395, 2
      %v567 = vsel %vm564, %v565, %v566
      %v568 = vrot.slane %v396, 2
      %v569 = vrot.slane %v397, 2
      %v570 = vsel %vm564, %v568, %v569
      %v571 = vrot.slane %v398, 2
      %v572 = vrot.slane %v399, 2
      %v573 = vsel %vm564, %v571, %v572
      %v574 = vrot.slane %v400, 2
      %v575 = vrot.slane %v401, 2
      %v576 = vsel %vm564, %v574, %v575
      %v577 = vrot.slane %v402, 2
      %v578 = vrot.slane %v403, 2
      %v579 = vsel %vm564, %v577, %v578
      %v580 = vrot.slane %v404, 2
      %v581 = vrot.slane %v405, 2
      %v582 = vsel %vm564, %v580, %v581
      %v583 = vrot.slane %v406, 2
      %v584 = vrot.slane %v407, 2
      %v585 = vsel %vm564, %v583, %v584
      %v586 = vrot.slane %v408, 2
      %v587 = vrot.slane %v409, 2
      %v588 = vsel %vm564, %v586, %v587
      %v597 = vpack.c.bf16 %v570, %v567
      %v598 = vpack.c.bf16 %v576, %v573
      %v599 = vpack.c.bf16 %v582, %v579
      %v600 = vpack.c.bf16 %v588, %v585
      %s601 = scalar_lea.vmem %s3, 4
      %v602 = vld [vmem:[%s601] sm:$0x3]
      %v604 = vsel %vm474, %v597, 0
      %v607 = vsel %vm474, %v598, 0
      %v610 = vsel %vm474, %v599, 0
      %v613 = vsel %vm474, %v600, 0
      %v616 = vsel %vm487, %v602, 0
      %618 = vmatpush.bf16.msra.mxu0 0
      %619 = vmatpush.bf16.msra.mxu0 0
      %620 = vmatpush.bf16.msra.mxu0 0
      %621 = vmatpush.bf16.msra.mxu0 0
      %622 = vmatpush.bf16.msra.mxu0 0
      %623 = vmatpush.bf16.msra.mxu0 0
      %624 = vmatpush.bf16.msra.mxu0 0
      %625 = vmatpush.bf16.msra.mxu0 %v616
      %626 = vmatmul.bf16.gmra.mxu0 %v604
      %v627 = vpop.f32.mrf.mxu0
      %v628 = vadd.f32 0.0, %v627
      %v629 = vpop.f32.mrf.mxu0
      %v630 = vadd.f32 0.0, %v629
      %631 = vmatmul.bf16.gmra.mxu0 %v607
      %v632 = vpop.f32.mrf.mxu0
      %v633 = vadd.f32 0.0, %v632
      %v634 = vpop.f32.mrf.mxu0
      %v635 = vadd.f32 0.0, %v634
      %636 = vmatmul.bf16.gmra.mxu0 %v610
      %v637 = vpop.f32.mrf.mxu0
      %v638 = vadd.f32 0.0, %v637
      %v639 = vpop.f32.mrf.mxu0
      %v640 = vadd.f32 0.0, %v639
      %641 = vmatmul.bf16.gmra.mxu0 %v613
      %v642 = vpop.f32.mrf.mxu0
      %v643 = vadd.f32 0.0, %v642
      %v644 = vpop.f32.mrf.mxu0
      %v645 = vadd.f32 0.0, %v644
      %646 = vdwg.mxu0
      %v647 = vadd.f32 %v545, %v628
      %v648 = vadd.f32 %v547, %v630
      %v649 = vadd.f32 %v550, %v633
      %v650 = vadd.f32 %v552, %v635
      %v651 = vadd.f32 %v555, %v638
      %v652 = vadd.f32 %v557, %v640
      %v653 = vadd.f32 %v560, %v643
      %v654 = vadd.f32 %v562, %v645
      %v655 = vpack.c.bf16 %v398, %v396
      %v656 = vpack.c.bf16 %v402, %v400
      %v657 = vpack.c.bf16 %v406, %v404
      %v658 = vpack.c.bf16 %v410, %v408
      %s659 = scalar_lea.vmem %s3, 6
      %v660 = vld [vmem:[%s659] sm:$0x3]
      %v662 = vsel %vm474, %v655, 0
      %v665 = vsel %vm474, %v656, 0
      %v668 = vsel %vm474, %v657, 0
      %v671 = vsel %vm474, %v658, 0
      %v674 = vsel %vm487, %v660, 0
      %676 = vmatpush.bf16.msra.mxu0 0
      %677 = vmatpush.bf16.msra.mxu0 0
      %678 = vmatpush.bf16.msra.mxu0 0
      %679 = vmatpush.bf16.msra.mxu0 0
      %680 = vmatpush.bf16.msra.mxu0 0
      %681 = vmatpush.bf16.msra.mxu0 0
      %682 = vmatpush.bf16.msra.mxu0 0
      %683 = vmatpush.bf16.msra.mxu0 %v674
      %684 = vmatmul.bf16.gmra.mxu0 %v662
      %v685 = vpop.f32.mrf.mxu0
      %v686 = vadd.f32 0.0, %v685
      %v687 = vpop.f32.mrf.mxu0
      %v688 = vadd.f32 0.0, %v687
      %689 = vmatmul.bf16.gmra.mxu0 %v665
      %v690 = vpop.f32.mrf.mxu0
      %v691 = vadd.f32 0.0, %v690
      %v692 = vpop.f32.mrf.mxu0
      %v693 = vadd.f32 0.0, %v692
      %694 = vmatmul.bf16.gmra.mxu0 %v668
      %v695 = vpop.f32.mrf.mxu0
      %v696 = vadd.f32 0.0, %v695
      %v697 = vpop.f32.mrf.mxu0
      %v698 = vadd.f32 0.0, %v697
      %699 = vmatmul.bf16.gmra.mxu0 %v671
      %v700 = vpop.f32.mrf.mxu0
      %v701 = vadd.f32 0.0, %v700
      %v702 = vpop.f32.mrf.mxu0
      %v703 = vadd.f32 0.0, %v702
      %704 = vdwg.mxu0
      %v705 = vadd.f32 %v647, %v686
      %v706 = vadd.f32 %v648, %v688
      %v707 = vadd.f32 %v649, %v691
      %v708 = vadd.f32 %v650, %v693
      %v709 = vadd.f32 %v651, %v696
      %v710 = vadd.f32 %v652, %v698
      %v711 = vadd.f32 %v653, %v701
      %v712 = vadd.f32 %v654, %v703
      %v715 = vrot.slane %v410, 1
      %v716 = vrot.slane %v411, 1
      %v717 = vsel %vm435, %v715, %v716
      %v719 = vpack.c.bf16 %v444, %v441
      %v720 = vpack.c.bf16 %v450, %v447
      %v721 = vpack.c.bf16 %v456, %v453
      %v722 = vpack.c.bf16 %v717, %v459
      %s723 = scalar_lea.vmem %s3, 8
      %v724 = vld [vmem:[%s723] sm:$0x3]
      %v726 = vsel %vm474, %v719, 0
      %v729 = vsel %vm474, %v720, 0
      %v732 = vsel %vm474, %v721, 0
      %v735 = vsel %vm474, %v722, 0
      %v738 = vsel %vm487, %v724, 0
      %740 = vmatpush.bf16.msra.mxu0 0
      %741 = vmatpush.bf16.msra.mxu0 0
      %742 = vmatpush.bf16.msra.mxu0 0
      %743 = vmatpush.bf16.msra.mxu0 0
      %744 = vmatpush.bf16.msra.mxu0 0
      %745 = vmatpush.bf16.msra.mxu0 0
      %746 = vmatpush.bf16.msra.mxu0 0
      %747 = vmatpush.bf16.msra.mxu0 %v738
      %748 = vmatmul.bf16.gmra.mxu0 %v726
      %v749 = vpop.f32.mrf.mxu0
      %v750 = vadd.f32 0.0, %v749
      %v751 = vpop.f32.mrf.mxu0
      %v752 = vadd.f32 0.0, %v751
      %753 = vmatmul.bf16.gmra.mxu0 %v729
      %v754 = vpop.f32.mrf.mxu0
      %v755 = vadd.f32 0.0, %v754
      %v756 = vpop.f32.mrf.mxu0
      %v757 = vadd.f32 0.0, %v756
      %758 = vmatmul.bf16.gmra.mxu0 %v732
      %v759 = vpop.f32.mrf.mxu0
      %v760 = vadd.f32 0.0, %v759
      %v761 = vpop.f32.mrf.mxu0
      %v762 = vadd.f32 0.0, %v761
      %763 = vmatmul.bf16.gmra.mxu0 %v735
      %v764 = vpop.f32.mrf.mxu0
      %v765 = vadd.f32 0.0, %v764
      %v766 = vpop.f32.mrf.mxu0
      %v767 = vadd.f32 0.0, %v766
      %768 = vdwg.mxu0
      %v769 = vadd.f32 %v705, %v750
      %v770 = vadd.f32 %v706, %v752
      %v771 = vadd.f32 %v707, %v755
      %v772 = vadd.f32 %v708, %v757
      %v773 = vadd.f32 %v709, %v760
      %v774 = vadd.f32 %v710, %v762
      %v775 = vadd.f32 %v711, %v765
      %v776 = vadd.f32 %v712, %v767
      %v777 = vrot.slane %v410, 2
      %v778 = vrot.slane %v411, 2
      %v779 = vsel %vm564, %v777, %v778
      %v781 = vpack.c.bf16 %v573, %v570
      %v782 = vpack.c.bf16 %v579, %v576
      %v783 = vpack.c.bf16 %v585, %v582
      %v784 = vpack.c.bf16 %v779, %v588
      %s785 = scalar_lea.vmem %s3, 10
      %v786 = vld [vmem:[%s785] sm:$0x3]
      %v788 = vsel %vm474, %v781, 0
      %v791 = vsel %vm474, %v782, 0
      %v794 = vsel %vm474, %v783, 0
      %v797 = vsel %vm474, %v784, 0
      %v800 = vsel %vm487, %v786, 0
      %802 = vmatpush.bf16.msra.mxu0 0
      %803 = vmatpush.bf16.msra.mxu0 0
      %804 = vmatpush.bf16.msra.mxu0 0
      %805 = vmatpush.bf16.msra.mxu0 0
      %806 = vmatpush.bf16.msra.mxu0 0
      %807 = vmatpush.bf16.msra.mxu0 0
      %808 = vmatpush.bf16.msra.mxu0 0
      %809 = vmatpush.bf16.msra.mxu0 %v800
      %810 = vmatmul.bf16.gmra.mxu0 %v788
      %v811 = vpop.f32.mrf.mxu0
      %v812 = vadd.f32 0.0, %v811
      %v813 = vpop.f32.mrf.mxu0
      %v814 = vadd.f32 0.0, %v813
      %815 = vmatmul.bf16.gmra.mxu0 %v791
      %v816 = vpop.f32.mrf.mxu0
      %v817 = vadd.f32 0.0, %v816
      %v818 = vpop.f32.mrf.mxu0
      %v819 = vadd.f32 0.0, %v818
      %820 = vmatmul.bf16.gmra.mxu0 %v794
      %v821 = vpop.f32.mrf.mxu0
      %v822 = vadd.f32 0.0, %v821
      %v823 = vpop.f32.mrf.mxu0
      %v824 = vadd.f32 0.0, %v823
      %825 = vmatmul.bf16.gmra.mxu0 %v797
      %v826 = vpop.f32.mrf.mxu0
      %v827 = vadd.f32 0.0, %v826
      %v828 = vpop.f32.mrf.mxu0
      %v829 = vadd.f32 0.0, %v828
      %830 = vdwg.mxu0
      %v831 = vadd.f32 %v769, %v812
      %v832 = vadd.f32 %v770, %v814
      %v833 = vadd.f32 %v771, %v817
      %v834 = vadd.f32 %v772, %v819
      %v835 = vadd.f32 %v773, %v822
      %v836 = vadd.f32 %v774, %v824
      %v837 = vadd.f32 %v775, %v827
      %v838 = vadd.f32 %v776, %v829
      %v839 = vpack.c.bf16 %v412, %v410
      %s840 = scalar_lea.vmem %s3, 12
      %v841 = vld [vmem:[%s840] sm:$0x3]
      %v843 = vsel %vm474, %v839, 0
      %v846 = vsel %vm487, %v841, 0
      %848 = vmatpush.bf16.msra.mxu0 0
      %849 = vmatpush.bf16.msra.mxu0 0
      %850 = vmatpush.bf16.msra.mxu0 0
      %851 = vmatpush.bf16.msra.mxu0 0
      %852 = vmatpush.bf16.msra.mxu0 0
      %853 = vmatpush.bf16.msra.mxu0 0
      %854 = vmatpush.bf16.msra.mxu0 0
      %855 = vmatpush.bf16.msra.mxu0 %v846
      %856 = vmatmul.bf16.gmra.mxu0 %v524
      %v857 = vpop.f32.mrf.mxu0
      %v858 = vadd.f32 0.0, %v857
      %v859 = vpop.f32.mrf.mxu0
      %v860 = vadd.f32 0.0, %v859
      %861 = vmatmul.bf16.gmra.mxu0 %v527
      %v862 = vpop.f32.mrf.mxu0
      %v863 = vadd.f32 0.0, %v862
      %v864 = vpop.f32.mrf.mxu0
      %v865 = vadd.f32 0.0, %v864
      %866 = vmatmul.bf16.gmra.mxu0 %v530
      %v867 = vpop.f32.mrf.mxu0
      %v868 = vadd.f32 0.0, %v867
      %v869 = vpop.f32.mrf.mxu0
      %v870 = vadd.f32 0.0, %v869
      %871 = vmatmul.bf16.gmra.mxu0 %v843
      %v872 = vpop.f32.mrf.mxu0
      %v873 = vadd.f32 0.0, %v872
      %v874 = vpop.f32.mrf.mxu0
      %v875 = vadd.f32 0.0, %v874
      %876 = vdwg.mxu0
      %v877 = vadd.f32 %v831, %v858
      %v878 = vadd.f32 %v832, %v860
      %v879 = vadd.f32 %v833, %v863
      %v880 = vadd.f32 %v834, %v865
      %v881 = vadd.f32 %v835, %v868
      %v882 = vadd.f32 %v836, %v870
      %v883 = vadd.f32 %v837, %v873
      %v884 = vadd.f32 %v838, %v875
      %v887 = vrot.slane %v412, 1
      %v888 = vrot.slane %v413, 1
      %v889 = vsel %vm435, %v887, %v888
      %v891 = vpack.c.bf16 %v889, %v717
      %s892 = scalar_lea.vmem %s3, 14
      %v893 = vld [vmem:[%s892] sm:$0x3]
      %v895 = vsel %vm474, %v891, 0
      %v898 = vsel %vm487, %v893, 0
      %900 = vmatpush.bf16.msra.mxu0 0
      %901 = vmatpush.bf16.msra.mxu0 0
      %902 = vmatpush.bf16.msra.mxu0 0
      %903 = vmatpush.bf16.msra.mxu0 0
      %904 = vmatpush.bf16.msra.mxu0 0
      %905 = vmatpush.bf16.msra.mxu0 0
      %906 = vmatpush.bf16.msra.mxu0 0
      %907 = vmatpush.bf16.msra.mxu0 %v898
      %908 = vmatmul.bf16.gmra.mxu0 %v479
      %v909 = vpop.f32.mrf.mxu0
      %v910 = vadd.f32 0.0, %v909
      %v911 = vpop.f32.mrf.mxu0
      %v912 = vadd.f32 0.0, %v911
      %913 = vmatmul.bf16.gmra.mxu0 %v482
      %v914 = vpop.f32.mrf.mxu0
      %v915 = vadd.f32 0.0, %v914
      %v916 = vpop.f32.mrf.mxu0
      %v917 = vadd.f32 0.0, %v916
      %918 = vmatmul.bf16.gmra.mxu0 %v485
      %v919 = vpop.f32.mrf.mxu0
      %v920 = vadd.f32 0.0, %v919
      %v921 = vpop.f32.mrf.mxu0
      %v922 = vadd.f32 0.0, %v921
      %923 = vmatmul.bf16.gmra.mxu0 %v895
      %v924 = vpop.f32.mrf.mxu0
      %v925 = vadd.f32 0.0, %v924
      %v926 = vpop.f32.mrf.mxu0
      %v927 = vadd.f32 0.0, %v926
      %928 = vdwg.mxu0
      %v929 = vadd.f32 %v877, %v910
      %v930 = vadd.f32 %v878, %v912
      %v931 = vadd.f32 %v879, %v915
      %v932 = vadd.f32 %v880, %v917
      %v933 = vadd.f32 %v881, %v920
      %v934 = vadd.f32 %v882, %v922
      %v935 = vadd.f32 %v883, %v925
      %v936 = vadd.f32 %v884, %v927
      %v937 = vrot.slane %v412, 2
      %v938 = vrot.slane %v413, 2
      %v939 = vsel %vm564, %v937, %v938
      %v941 = vpack.c.bf16 %v939, %v779
      %s942 = scalar_lea.vmem %s3, 16
      %v943 = vld [vmem:[%s942] sm:$0x3]
      %v945 = vsel %vm474, %v941, 0
      %v948 = vsel %vm487, %v943, 0
      %950 = vmatpush.bf16.msra.mxu0 0
      %951 = vmatpush.bf16.msra.mxu0 0
      %952 = vmatpush.bf16.msra.mxu0 0
      %953 = vmatpush.bf16.msra.mxu0 0
      %954 = vmatpush.bf16.msra.mxu0 0
      %955 = vmatpush.bf16.msra.mxu0 0
      %956 = vmatpush.bf16.msra.mxu0 0
      %957 = vmatpush.bf16.msra.mxu0 %v948
      %958 = vmatmul.bf16.gmra.mxu0 %v607
      %v959 = vpop.f32.mrf.mxu0
      %v960 = vadd.f32 0.0, %v959
      %v961 = vpop.f32.mrf.mxu0
      %v962 = vadd.f32 0.0, %v961
      %963 = vmatmul.bf16.gmra.mxu0 %v610
      %v964 = vpop.f32.mrf.mxu0
      %v965 = vadd.f32 0.0, %v964
      %v966 = vpop.f32.mrf.mxu0
      %v967 = vadd.f32 0.0, %v966
      %968 = vmatmul.bf16.gmra.mxu0 %v613
      %v969 = vpop.f32.mrf.mxu0
      %v970 = vadd.f32 0.0, %v969
      %v971 = vpop.f32.mrf.mxu0
      %v972 = vadd.f32 0.0, %v971
      %973 = vmatmul.bf16.gmra.mxu0 %v945
      %v974 = vpop.f32.mrf.mxu0
      %v975 = vadd.f32 0.0, %v974
      %v976 = vpop.f32.mrf.mxu0
      %v977 = vadd.f32 0.0, %v976
      %978 = vdwg.mxu0
      %v979 = vadd.f32 %v929, %v960
      %v980 = vadd.f32 %v930, %v962
      %v981 = vadd.f32 %v931, %v965
      %v982 = vadd.f32 %v932, %v967
      %v983 = vadd.f32 %v933, %v970
      %v984 = vadd.f32 %v934, %v972
      %v985 = vadd.f32 %v935, %v975
      %v986 = vadd.f32 %v936, %v977
      %v987 = vld [vmem:[%s343] sm:$0xf]
      %v988 = vld [vmem:[%s343 + $0x4] sm:$0x1]
      %v989 = vld [vmem:[%s343 + $0x8] sm:$0xf]
      %v990 = vld [vmem:[%s343 + $0xc] sm:$0x1]
      %v991 = vld [vmem:[%s343 + $0x10] sm:$0xf]
      %v992 = vld [vmem:[%s343 + $0x14] sm:$0x1]
      %v993 = vld [vmem:[%s343 + $0x18] sm:$0xf]
      %v994 = vld [vmem:[%s343 + $0x1c] sm:$0x1]
      %v995 = vld [vmem:[%s343 + $0x20] sm:$0xf]
      %v996 = vld [vmem:[%s343 + $0x24] sm:$0x1]
      %v997 = vld [vmem:[%s343 + $0x28] sm:$0xf]
      %v998 = vld [vmem:[%s343 + $0x2c] sm:$0x1]
      %v999 = vld [vmem:[%s343 + $0x30] sm:$0xf]
      %v1000 = vld [vmem:[%s343 + $0x34] sm:$0x1]
      %v1001 = vld [vmem:[%s343 + $0x38] sm:$0xf]
      %v1002 = vld [vmem:[%s343 + $0x3c] sm:$0x1]
      %v1003 = vld [vmem:[%s343 + $0x40] sm:$0xf]
      %v1004 = vld [vmem:[%s343 + $0x44] sm:$0x1]
      %v1005 = vld [vmem:[%s343 + $0x48] sm:$0xf]
      %v1006 = vld [vmem:[%s343 + $0x4c] sm:$0x1]
      %v1007 = vunpack.c.l.bf16 %v987
      %v1008 = vunpack.c.l.bf16 %v988
      %v1009 = vunpack.c.l.bf16 %v989
      %v1010 = vunpack.c.l.bf16 %v990
      %v1011 = vunpack.c.l.bf16 %v991
      %v1012 = vunpack.c.l.bf16 %v992
      %v1013 = vunpack.c.l.bf16 %v993
      %v1014 = vunpack.c.l.bf16 %v994
      %v1015 = vunpack.c.l.bf16 %v995
      %v1016 = vunpack.c.l.bf16 %v996
      %v1017 = vunpack.c.l.bf16 %v997
      %v1018 = vunpack.c.l.bf16 %v998
      %v1019 = vunpack.c.l.bf16 %v999
      %v1020 = vunpack.c.l.bf16 %v1000
      %v1021 = vunpack.c.l.bf16 %v1001
      %v1022 = vunpack.c.l.bf16 %v1002
      %v1023 = vunpack.c.l.bf16 %v1003
      %v1024 = vunpack.c.l.bf16 %v1004
      %v1025 = vunpack.c.l.bf16 %v1005
      %v1026 = vunpack.c.l.bf16 %v1006
      %v1027 = vpack.c.bf16 %v1009, %v1007
      %v1028 = vpack.c.bf16 %v1013, %v1011
      %v1029 = vpack.c.bf16 %v1017, %v1015
      %v1030 = vpack.c.bf16 %v1021, %v1019
      %s1031 = scalar_lea.vmem %s3, 18
      %v1032 = vld [vmem:[%s1031] sm:$0x3]
      %v1034 = vsel %vm474, %v1027, 0
      %v1037 = vsel %vm474, %v1028, 0
      %v1040 = vsel %vm474, %v1029, 0
      %v1043 = vsel %vm474, %v1030, 0
      %v1046 = vsel %vm487, %v1032, 0
      %1048 = vmatpush.bf16.msra.mxu0 0
      %1049 = vmatpush.bf16.msra.mxu0 0
      %1050 = vmatpush.bf16.msra.mxu0 0
      %1051 = vmatpush.bf16.msra.mxu0 0
      %1052 = vmatpush.bf16.msra.mxu0 0
      %1053 = vmatpush.bf16.msra.mxu0 0
      %1054 = vmatpush.bf16.msra.mxu0 0
      %1055 = vmatpush.bf16.msra.mxu0 %v1046
      %1056 = vmatmul.bf16.gmra.mxu0 %v1034
      %v1057 = vpop.f32.mrf.mxu0
      %v1058 = vadd.f32 0.0, %v1057
      %v1059 = vpop.f32.mrf.mxu0
      %v1060 = vadd.f32 0.0, %v1059
      %1061 = vmatmul.bf16.gmra.mxu0 %v1037
      %v1062 = vpop.f32.mrf.mxu0
      %v1063 = vadd.f32 0.0, %v1062
      %v1064 = vpop.f32.mrf.mxu0
      %v1065 = vadd.f32 0.0, %v1064
      %1066 = vmatmul.bf16.gmra.mxu0 %v1040
      %v1067 = vpop.f32.mrf.mxu0
      %v1068 = vadd.f32 0.0, %v1067
      %v1069 = vpop.f32.mrf.mxu0
      %v1070 = vadd.f32 0.0, %v1069
      %1071 = vmatmul.bf16.gmra.mxu0 %v1043
      %v1072 = vpop.f32.mrf.mxu0
      %v1073 = vadd.f32 0.0, %v1072
      %v1074 = vpop.f32.mrf.mxu0
      %v1075 = vadd.f32 0.0, %v1074
      %1076 = vdwg.mxu0
      %v1077 = vadd.f32 %v979, %v1058
      %v1078 = vadd.f32 %v980, %v1060
      %v1079 = vadd.f32 %v981, %v1063
      %v1080 = vadd.f32 %v982, %v1065
      %v1081 = vadd.f32 %v983, %v1068
      %v1082 = vadd.f32 %v984, %v1070
      %v1083 = vadd.f32 %v985, %v1073
      %v1084 = vadd.f32 %v986, %v1075
      %v1101 = vrot.slane %v1007, 1
      %v1102 = vrot.slane %v1008, 1
      %v1103 = vsel %vm435, %v1101, %v1102
      %v1104 = vrot.slane %v1009, 1
      %v1105 = vrot.slane %v1010, 1
      %v1106 = vsel %vm435, %v1104, %v1105
      %v1107 = vrot.slane %v1011, 1
      %v1108 = vrot.slane %v1012, 1
      %v1109 = vsel %vm435, %v1107, %v1108
      %v1110 = vrot.slane %v1013, 1
      %v1111 = vrot.slane %v1014, 1
      %v1112 = vsel %vm435, %v1110, %v1111
      %v1113 = vrot.slane %v1015, 1
      %v1114 = vrot.slane %v1016, 1
      %v1115 = vsel %vm435, %v1113, %v1114
      %v1116 = vrot.slane %v1017, 1
      %v1117 = vrot.slane %v1018, 1
      %v1118 = vsel %vm435, %v1116, %v1117
      %v1119 = vrot.slane %v1019, 1
      %v1120 = vrot.slane %v1020, 1
      %v1121 = vsel %vm435, %v1119, %v1120
      %v1122 = vrot.slane %v1021, 1
      %v1123 = vrot.slane %v1022, 1
      %v1124 = vsel %vm435, %v1122, %v1123
      %v1133 = vpack.c.bf16 %v1106, %v1103
      %v1134 = vpack.c.bf16 %v1112, %v1109
      %v1135 = vpack.c.bf16 %v1118, %v1115
      %v1136 = vpack.c.bf16 %v1124, %v1121
      %s1137 = scalar_lea.vmem %s3, 20
      %v1138 = vld [vmem:[%s1137] sm:$0x3]
      %v1140 = vsel %vm474, %v1133, 0
      %v1143 = vsel %vm474, %v1134, 0
      %v1146 = vsel %vm474, %v1135, 0
      %v1149 = vsel %vm474, %v1136, 0
      %v1152 = vsel %vm487, %v1138, 0
      %1154 = vmatpush.bf16.msra.mxu0 0
      %1155 = vmatpush.bf16.msra.mxu0 0
      %1156 = vmatpush.bf16.msra.mxu0 0
      %1157 = vmatpush.bf16.msra.mxu0 0
      %1158 = vmatpush.bf16.msra.mxu0 0
      %1159 = vmatpush.bf16.msra.mxu0 0
      %1160 = vmatpush.bf16.msra.mxu0 0
      %1161 = vmatpush.bf16.msra.mxu0 %v1152
      %1162 = vmatmul.bf16.gmra.mxu0 %v1140
      %v1163 = vpop.f32.mrf.mxu0
      %v1164 = vadd.f32 0.0, %v1163
      %v1165 = vpop.f32.mrf.mxu0
      %v1166 = vadd.f32 0.0, %v1165
      %1167 = vmatmul.bf16.gmra.mxu0 %v1143
      %v1168 = vpop.f32.mrf.mxu0
      %v1169 = vadd.f32 0.0, %v1168
      %v1170 = vpop.f32.mrf.mxu0
      %v1171 = vadd.f32 0.0, %v1170
      %1172 = vmatmul.bf16.gmra.mxu0 %v1146
      %v1173 = vpop.f32.mrf.mxu0
      %v1174 = vadd.f32 0.0, %v1173
      %v1175 = vpop.f32.mrf.mxu0
      %v1176 = vadd.f32 0.0, %v1175
      %1177 = vmatmul.bf16.gmra.mxu0 %v1149
      %v1178 = vpop.f32.mrf.mxu0
      %v1179 = vadd.f32 0.0, %v1178
      %v1180 = vpop.f32.mrf.mxu0
      %v1181 = vadd.f32 0.0, %v1180
      %1182 = vdwg.mxu0
      %v1183 = vadd.f32 %v1077, %v1164
      %v1184 = vadd.f32 %v1078, %v1166
      %v1185 = vadd.f32 %v1079, %v1169
      %v1186 = vadd.f32 %v1080, %v1171
      %v1187 = vadd.f32 %v1081, %v1174
      %v1188 = vadd.f32 %v1082, %v1176
      %v1189 = vadd.f32 %v1083, %v1179
      %v1190 = vadd.f32 %v1084, %v1181
      %v1191 = vrot.slane %v1007, 2
      %v1192 = vrot.slane %v1008, 2
      %v1193 = vsel %vm564, %v1191, %v1192
      %v1194 = vrot.slane %v1009, 2
      %v1195 = vrot.slane %v1010, 2
      %v1196 = vsel %vm564, %v1194, %v1195
      %v1197 = vrot.slane %v1011, 2
      %v1198 = vrot.slane %v1012, 2
      %v1199 = vsel %vm564, %v1197, %v1198
      %v1200 = vrot.slane %v1013, 2
      %v1201 = vrot.slane %v1014, 2
      %v1202 = vsel %vm564, %v1200, %v1201
      %v1203 = vrot.slane %v1015, 2
      %v1204 = vrot.slane %v1016, 2
      %v1205 = vsel %vm564, %v1203, %v1204
      %v1206 = vrot.slane %v1017, 2
      %v1207 = vrot.slane %v1018, 2
      %v1208 = vsel %vm564, %v1206, %v1207
      %v1209 = vrot.slane %v1019, 2
      %v1210 = vrot.slane %v1020, 2
      %v1211 = vsel %vm564, %v1209, %v1210
      %v1212 = vrot.slane %v1021, 2
      %v1213 = vrot.slane %v1022, 2
      %v1214 = vsel %vm564, %v1212, %v1213
      %v1223 = vpack.c.bf16 %v1196, %v1193
      %v1224 = vpack.c.bf16 %v1202, %v1199
      %v1225 = vpack.c.bf16 %v1208, %v1205
      %v1226 = vpack.c.bf16 %v1214, %v1211
      %s1227 = scalar_lea.vmem %s3, 22
      %v1228 = vld [vmem:[%s1227] sm:$0x3]
      %v1230 = vsel %vm474, %v1223, 0
      %v1233 = vsel %vm474, %v1224, 0
      %v1236 = vsel %vm474, %v1225, 0
      %v1239 = vsel %vm474, %v1226, 0
      %v1242 = vsel %vm487, %v1228, 0
      %1244 = vmatpush.bf16.msra.mxu0 0
      %1245 = vmatpush.bf16.msra.mxu0 0
      %1246 = vmatpush.bf16.msra.mxu0 0
      %1247 = vmatpush.bf16.msra.mxu0 0
      %1248 = vmatpush.bf16.msra.mxu0 0
      %1249 = vmatpush.bf16.msra.mxu0 0
      %1250 = vmatpush.bf16.msra.mxu0 0
      %1251 = vmatpush.bf16.msra.mxu0 %v1242
      %1252 = vmatmul.bf16.gmra.mxu0 %v1230
      %v1253 = vpop.f32.mrf.mxu0
      %v1254 = vadd.f32 0.0, %v1253
      %v1255 = vpop.f32.mrf.mxu0
      %v1256 = vadd.f32 0.0, %v1255
      %1257 = vmatmul.bf16.gmra.mxu0 %v1233
      %v1258 = vpop.f32.mrf.mxu0
      %v1259 = vadd.f32 0.0, %v1258
      %v1260 = vpop.f32.mrf.mxu0
      %v1261 = vadd.f32 0.0, %v1260
      %1262 = vmatmul.bf16.gmra.mxu0 %v1236
      %v1263 = vpop.f32.mrf.mxu0
      %v1264 = vadd.f32 0.0, %v1263
      %v1265 = vpop.f32.mrf.mxu0
      %v1266 = vadd.f32 0.0, %v1265
      %1267 = vmatmul.bf16.gmra.mxu0 %v1239
      %v1268 = vpop.f32.mrf.mxu0
      %v1269 = vadd.f32 0.0, %v1268
      %v1270 = vpop.f32.mrf.mxu0
      %v1271 = vadd.f32 0.0, %v1270
      %1272 = vdwg.mxu0
      %v1273 = vadd.f32 %v1183, %v1254
      %v1274 = vadd.f32 %v1184, %v1256
      %v1275 = vadd.f32 %v1185, %v1259
      %v1276 = vadd.f32 %v1186, %v1261
      %v1277 = vadd.f32 %v1187, %v1264
      %v1278 = vadd.f32 %v1188, %v1266
      %v1279 = vadd.f32 %v1189, %v1269
      %v1280 = vadd.f32 %v1190, %v1271
      %v1281 = vpack.c.bf16 %v1011, %v1009
      %v1282 = vpack.c.bf16 %v1015, %v1013
      %v1283 = vpack.c.bf16 %v1019, %v1017
      %v1284 = vpack.c.bf16 %v1023, %v1021
      %s1285 = scalar_lea.vmem %s3, 24
      %v1286 = vld [vmem:[%s1285] sm:$0x3]
      %v1288 = vsel %vm474, %v1281, 0
      %v1291 = vsel %vm474, %v1282, 0
      %v1294 = vsel %vm474, %v1283, 0
      %v1297 = vsel %vm474, %v1284, 0
      %v1300 = vsel %vm487, %v1286, 0
      %1302 = vmatpush.bf16.msra.mxu0 0
      %1303 = vmatpush.bf16.msra.mxu0 0
      %1304 = vmatpush.bf16.msra.mxu0 0
      %1305 = vmatpush.bf16.msra.mxu0 0
      %1306 = vmatpush.bf16.msra.mxu0 0
      %1307 = vmatpush.bf16.msra.mxu0 0
      %1308 = vmatpush.bf16.msra.mxu0 0
      %1309 = vmatpush.bf16.msra.mxu0 %v1300
      %1310 = vmatmul.bf16.gmra.mxu0 %v1288
      %v1311 = vpop.f32.mrf.mxu0
      %v1312 = vadd.f32 0.0, %v1311
      %v1313 = vpop.f32.mrf.mxu0
      %v1314 = vadd.f32 0.0, %v1313
      %1315 = vmatmul.bf16.gmra.mxu0 %v1291
      %v1316 = vpop.f32.mrf.mxu0
      %v1317 = vadd.f32 0.0, %v1316
      %v1318 = vpop.f32.mrf.mxu0
      %v1319 = vadd.f32 0.0, %v1318
      %1320 = vmatmul.bf16.gmra.mxu0 %v1294
      %v1321 = vpop.f32.mrf.mxu0
      %v1322 = vadd.f32 0.0, %v1321
      %v1323 = vpop.f32.mrf.mxu0
      %v1324 = vadd.f32 0.0, %v1323
      %1325 = vmatmul.bf16.gmra.mxu0 %v1297
      %v1326 = vpop.f32.mrf.mxu0
      %v1327 = vadd.f32 0.0, %v1326
      %v1328 = vpop.f32.mrf.mxu0
      %v1329 = vadd.f32 0.0, %v1328
      %1330 = vdwg.mxu0
      %v1331 = vadd.f32 %v1273, %v1312
      %v1332 = vadd.f32 %v1274, %v1314
      %v1333 = vadd.f32 %v1275, %v1317
      %v1334 = vadd.f32 %v1276, %v1319
      %v1335 = vadd.f32 %v1277, %v1322
      %v1336 = vadd.f32 %v1278, %v1324
      %v1337 = vadd.f32 %v1279, %v1327
      %v1338 = vadd.f32 %v1280, %v1329
      %v1341 = vrot.slane %v1023, 1
      %v1342 = vrot.slane %v1024, 1
      %v1343 = vsel %vm435, %v1341, %v1342
      %v1345 = vpack.c.bf16 %v1109, %v1106
      %v1346 = vpack.c.bf16 %v1115, %v1112
      %v1347 = vpack.c.bf16 %v1121, %v1118
      %v1348 = vpack.c.bf16 %v1343, %v1124
      %s1349 = scalar_lea.vmem %s3, 26
      %v1350 = vld [vmem:[%s1349] sm:$0x3]
      %v1352 = vsel %vm474, %v1345, 0
      %v1355 = vsel %vm474, %v1346, 0
      %v1358 = vsel %vm474, %v1347, 0
      %v1361 = vsel %vm474, %v1348, 0
      %v1364 = vsel %vm487, %v1350, 0
      %1366 = vmatpush.bf16.msra.mxu0 0
      %1367 = vmatpush.bf16.msra.mxu0 0
      %1368 = vmatpush.bf16.msra.mxu0 0
      %1369 = vmatpush.bf16.msra.mxu0 0
      %1370 = vmatpush.bf16.msra.mxu0 0
      %1371 = vmatpush.bf16.msra.mxu0 0
      %1372 = vmatpush.bf16.msra.mxu0 0
      %1373 = vmatpush.bf16.msra.mxu0 %v1364
      %1374 = vmatmul.bf16.gmra.mxu0 %v1352
      %v1375 = vpop.f32.mrf.mxu0
      %v1376 = vadd.f32 0.0, %v1375
      %v1377 = vpop.f32.mrf.mxu0
      %v1378 = vadd.f32 0.0, %v1377
      %1379 = vmatmul.bf16.gmra.mxu0 %v1355
      %v1380 = vpop.f32.mrf.mxu0
      %v1381 = vadd.f32 0.0, %v1380
      %v1382 = vpop.f32.mrf.mxu0
      %v1383 = vadd.f32 0.0, %v1382
      %1384 = vmatmul.bf16.gmra.mxu0 %v1358
      %v1385 = vpop.f32.mrf.mxu0
      %v1386 = vadd.f32 0.0, %v1385
      %v1387 = vpop.f32.mrf.mxu0
      %v1388 = vadd.f32 0.0, %v1387
      %1389 = vmatmul.bf16.gmra.mxu0 %v1361
      %v1390 = vpop.f32.mrf.mxu0
      %v1391 = vadd.f32 0.0, %v1390
      %v1392 = vpop.f32.mrf.mxu0
      %v1393 = vadd.f32 0.0, %v1392
      %1394 = vdwg.mxu0
      %v1395 = vadd.f32 %v1331, %v1376
      %v1396 = vadd.f32 %v1332, %v1378
      %v1397 = vadd.f32 %v1333, %v1381
      %v1398 = vadd.f32 %v1334, %v1383
      %v1399 = vadd.f32 %v1335, %v1386
      %v1400 = vadd.f32 %v1336, %v1388
      %v1401 = vadd.f32 %v1337, %v1391
      %v1402 = vadd.f32 %v1338, %v1393
      %v1403 = vrot.slane %v1023, 2
      %v1404 = vrot.slane %v1024, 2
      %v1405 = vsel %vm564, %v1403, %v1404
      %v1407 = vpack.c.bf16 %v1199, %v1196
      %v1408 = vpack.c.bf16 %v1205, %v1202
      %v1409 = vpack.c.bf16 %v1211, %v1208
      %v1410 = vpack.c.bf16 %v1405, %v1214
      %s1411 = scalar_lea.vmem %s3, 28
      %v1412 = vld [vmem:[%s1411] sm:$0x3]
      %v1414 = vsel %vm474, %v1407, 0
      %v1417 = vsel %vm474, %v1408, 0
      %v1420 = vsel %vm474, %v1409, 0
      %v1423 = vsel %vm474, %v1410, 0
      %v1426 = vsel %vm487, %v1412, 0
      %1428 = vmatpush.bf16.msra.mxu0 0
      %1429 = vmatpush.bf16.msra.mxu0 0
      %1430 = vmatpush.bf16.msra.mxu0 0
      %1431 = vmatpush.bf16.msra.mxu0 0
      %1432 = vmatpush.bf16.msra.mxu0 0
      %1433 = vmatpush.bf16.msra.mxu0 0
      %1434 = vmatpush.bf16.msra.mxu0 0
      %1435 = vmatpush.bf16.msra.mxu0 %v1426
      %1436 = vmatmul.bf16.gmra.mxu0 %v1414
      %v1437 = vpop.f32.mrf.mxu0
      %v1438 = vadd.f32 0.0, %v1437
      %v1439 = vpop.f32.mrf.mxu0
      %v1440 = vadd.f32 0.0, %v1439
      %1441 = vmatmul.bf16.gmra.mxu0 %v1417
      %v1442 = vpop.f32.mrf.mxu0
      %v1443 = vadd.f32 0.0, %v1442
      %v1444 = vpop.f32.mrf.mxu0
      %v1445 = vadd.f32 0.0, %v1444
      %1446 = vmatmul.bf16.gmra.mxu0 %v1420
      %v1447 = vpop.f32.mrf.mxu0
      %v1448 = vadd.f32 0.0, %v1447
      %v1449 = vpop.f32.mrf.mxu0
      %v1450 = vadd.f32 0.0, %v1449
      %1451 = vmatmul.bf16.gmra.mxu0 %v1423
      %v1452 = vpop.f32.mrf.mxu0
      %v1453 = vadd.f32 0.0, %v1452
      %v1454 = vpop.f32.mrf.mxu0
      %v1455 = vadd.f32 0.0, %v1454
      %1456 = vdwg.mxu0
      %v1457 = vadd.f32 %v1395, %v1438
      %v1458 = vadd.f32 %v1396, %v1440
      %v1459 = vadd.f32 %v1397, %v1443
      %v1460 = vadd.f32 %v1398, %v1445
      %v1461 = vadd.f32 %v1399, %v1448
      %v1462 = vadd.f32 %v1400, %v1450
      %v1463 = vadd.f32 %v1401, %v1453
      %v1464 = vadd.f32 %v1402, %v1455
      %v1465 = vpack.c.bf16 %v1025, %v1023
      %s1466 = scalar_lea.vmem %s3, 30
      %v1467 = vld [vmem:[%s1466] sm:$0x3]
      %v1469 = vsel %vm474, %v1465, 0
      %v1472 = vsel %vm487, %v1467, 0
      %1474 = vmatpush.bf16.msra.mxu0 0
      %1475 = vmatpush.bf16.msra.mxu0 0
      %1476 = vmatpush.bf16.msra.mxu0 0
      %1477 = vmatpush.bf16.msra.mxu0 0
      %1478 = vmatpush.bf16.msra.mxu0 0
      %1479 = vmatpush.bf16.msra.mxu0 0
      %1480 = vmatpush.bf16.msra.mxu0 0
      %1481 = vmatpush.bf16.msra.mxu0 %v1472
      %1482 = vmatmul.bf16.gmra.mxu0 %v1037
      %v1483 = vpop.f32.mrf.mxu0
      %v1484 = vadd.f32 0.0, %v1483
      %v1485 = vpop.f32.mrf.mxu0
      %v1486 = vadd.f32 0.0, %v1485
      %1487 = vmatmul.bf16.gmra.mxu0 %v1040
      %v1488 = vpop.f32.mrf.mxu0
      %v1489 = vadd.f32 0.0, %v1488
      %v1490 = vpop.f32.mrf.mxu0
      %v1491 = vadd.f32 0.0, %v1490
      %1492 = vmatmul.bf16.gmra.mxu0 %v1043
      %v1493 = vpop.f32.mrf.mxu0
      %v1494 = vadd.f32 0.0, %v1493
      %v1495 = vpop.f32.mrf.mxu0
      %v1496 = vadd.f32 0.0, %v1495
      %1497 = vmatmul.bf16.gmra.mxu0 %v1469
      %v1498 = vpop.f32.mrf.mxu0
      %v1499 = vadd.f32 0.0, %v1498
      %v1500 = vpop.f32.mrf.mxu0
      %v1501 = vadd.f32 0.0, %v1500
      %1502 = vdwg.mxu0
      %v1503 = vadd.f32 %v1457, %v1484
      %v1504 = vadd.f32 %v1458, %v1486
      %v1505 = vadd.f32 %v1459, %v1489
      %v1506 = vadd.f32 %v1460, %v1491
      %v1507 = vadd.f32 %v1461, %v1494
      %v1508 = vadd.f32 %v1462, %v1496
      %v1509 = vadd.f32 %v1463, %v1499
      %v1510 = vadd.f32 %v1464, %v1501
      %v1513 = vrot.slane %v1025, 1
      %v1514 = vrot.slane %v1026, 1
      %v1515 = vsel %vm435, %v1513, %v1514
      %v1517 = vpack.c.bf16 %v1515, %v1343
      %s1518 = scalar_lea.vmem %s3, 32
      %v1519 = vld [vmem:[%s1518] sm:$0x3]
      %v1521 = vsel %vm474, %v1517, 0
      %v1524 = vsel %vm487, %v1519, 0
      %1526 = vmatpush.bf16.msra.mxu0 0
      %1527 = vmatpush.bf16.msra.mxu0 0
      %1528 = vmatpush.bf16.msra.mxu0 0
      %1529 = vmatpush.bf16.msra.mxu0 0
      %1530 = vmatpush.bf16.msra.mxu0 0
      %1531 = vmatpush.bf16.msra.mxu0 0
      %1532 = vmatpush.bf16.msra.mxu0 0
      %1533 = vmatpush.bf16.msra.mxu0 %v1524
      %1534 = vmatmul.bf16.gmra.mxu0 %v1143
      %v1535 = vpop.f32.mrf.mxu0
      %v1536 = vadd.f32 0.0, %v1535
      %v1537 = vpop.f32.mrf.mxu0
      %v1538 = vadd.f32 0.0, %v1537
      %1539 = vmatmul.bf16.gmra.mxu0 %v1146
      %v1540 = vpop.f32.mrf.mxu0
      %v1541 = vadd.f32 0.0, %v1540
      %v1542 = vpop.f32.mrf.mxu0
      %v1543 = vadd.f32 0.0, %v1542
      %1544 = vmatmul.bf16.gmra.mxu0 %v1149
      %v1545 = vpop.f32.mrf.mxu0
      %v1546 = vadd.f32 0.0, %v1545
      %v1547 = vpop.f32.mrf.mxu0
      %v1548 = vadd.f32 0.0, %v1547
      %1549 = vmatmul.bf16.gmra.mxu0 %v1521
      %v1550 = vpop.f32.mrf.mxu0
      %v1551 = vadd.f32 0.0, %v1550
      %v1552 = vpop.f32.mrf.mxu0
      %v1553 = vadd.f32 0.0, %v1552
      %1554 = vdwg.mxu0
      %v1555 = vadd.f32 %v1503, %v1536
      %v1556 = vadd.f32 %v1504, %v1538
      %v1557 = vadd.f32 %v1505, %v1541
      %v1558 = vadd.f32 %v1506, %v1543
      %v1559 = vadd.f32 %v1507, %v1546
      %v1560 = vadd.f32 %v1508, %v1548
      %v1561 = vadd.f32 %v1509, %v1551
      %v1562 = vadd.f32 %v1510, %v1553
      %v1563 = vrot.slane %v1025, 2
      %v1564 = vrot.slane %v1026, 2
      %v1565 = vsel %vm564, %v1563, %v1564
      %v1567 = vpack.c.bf16 %v1565, %v1405
      %s1568 = scalar_lea.vmem %s3, 34
      %v1569 = vld [vmem:[%s1568] sm:$0x3]
      %v1571 = vsel %vm474, %v1567, 0
      %v1574 = vsel %vm487, %v1569, 0
      %1576 = vmatpush.bf16.msra.mxu0 0
      %1577 = vmatpush.bf16.msra.mxu0 0
      %1578 = vmatpush.bf16.msra.mxu0 0
      %1579 = vmatpush.bf16.msra.mxu0 0
      %1580 = vmatpush.bf16.msra.mxu0 0
      %1581 = vmatpush.bf16.msra.mxu0 0
      %1582 = vmatpush.bf16.msra.mxu0 0
      %1583 = vmatpush.bf16.msra.mxu0 %v1574
      %1584 = vmatmul.bf16.gmra.mxu0 %v1233
      %v1585 = vpop.f32.mrf.mxu0
      %v1586 = vadd.f32 0.0, %v1585
      %v1587 = vpop.f32.mrf.mxu0
      %v1588 = vadd.f32 0.0, %v1587
      %1589 = vmatmul.bf16.gmra.mxu0 %v1236
      %v1590 = vpop.f32.mrf.mxu0
      %v1591 = vadd.f32 0.0, %v1590
      %v1592 = vpop.f32.mrf.mxu0
      %v1593 = vadd.f32 0.0, %v1592
      %1594 = vmatmul.bf16.gmra.mxu0 %v1239
      %v1595 = vpop.f32.mrf.mxu0
      %v1596 = vadd.f32 0.0, %v1595
      %v1597 = vpop.f32.mrf.mxu0
      %v1598 = vadd.f32 0.0, %v1597
      %1599 = vmatmul.bf16.gmra.mxu0 %v1571
      %v1600 = vpop.f32.mrf.mxu0
      %v1601 = vadd.f32 0.0, %v1600
      %v1602 = vpop.f32.mrf.mxu0
      %v1603 = vadd.f32 0.0, %v1602
      %1604 = vdwg.mxu0
      %v1605 = vadd.f32 %v1555, %v1586
      %v1606 = vadd.f32 %v1556, %v1588
      %v1607 = vadd.f32 %v1557, %v1591
      %v1608 = vadd.f32 %v1558, %v1593
      %v1609 = vadd.f32 %v1559, %v1596
      %v1610 = vadd.f32 %v1560, %v1598
      %v1611 = vadd.f32 %v1561, %v1601
      %v1612 = vadd.f32 %v1562, %v1603
      %v1613 = vld [vmem:[%s354] sm:$0xf]
      %v1614 = vld [vmem:[%s354 + $0x4] sm:$0x1]
      %v1615 = vld [vmem:[%s354 + $0x8] sm:$0xf]
      %v1616 = vld [vmem:[%s354 + $0xc] sm:$0x1]
      %v1617 = vld [vmem:[%s354 + $0x10] sm:$0xf]
      %v1618 = vld [vmem:[%s354 + $0x14] sm:$0x1]
      %v1619 = vld [vmem:[%s354 + $0x18] sm:$0xf]
      %v1620 = vld [vmem:[%s354 + $0x1c] sm:$0x1]
      %v1621 = vld [vmem:[%s354 + $0x20] sm:$0xf]
      %v1622 = vld [vmem:[%s354 + $0x24] sm:$0x1]
      %v1623 = vld [vmem:[%s354 + $0x28] sm:$0xf]
      %v1624 = vld [vmem:[%s354 + $0x2c] sm:$0x1]
      %v1625 = vld [vmem:[%s354 + $0x30] sm:$0xf]
      %v1626 = vld [vmem:[%s354 + $0x34] sm:$0x1]
      %v1627 = vld [vmem:[%s354 + $0x38] sm:$0xf]
      %v1628 = vld [vmem:[%s354 + $0x3c] sm:$0x1]
      %v1629 = vld [vmem:[%s354 + $0x40] sm:$0xf]
      %v1630 = vld [vmem:[%s354 + $0x44] sm:$0x1]
      %v1631 = vld [vmem:[%s354 + $0x48] sm:$0xf]
      %v1632 = vld [vmem:[%s354 + $0x4c] sm:$0x1]
      %v1633 = vunpack.c.l.bf16 %v1613
      %v1634 = vunpack.c.l.bf16 %v1614
      %v1635 = vunpack.c.l.bf16 %v1615
      %v1636 = vunpack.c.l.bf16 %v1616
      %v1637 = vunpack.c.l.bf16 %v1617
      %v1638 = vunpack.c.l.bf16 %v1618
      %v1639 = vunpack.c.l.bf16 %v1619
      %v1640 = vunpack.c.l.bf16 %v1620
      %v1641 = vunpack.c.l.bf16 %v1621
      %v1642 = vunpack.c.l.bf16 %v1622
      %v1643 = vunpack.c.l.bf16 %v1623
      %v1644 = vunpack.c.l.bf16 %v1624
      %v1645 = vunpack.c.l.bf16 %v1625
      %v1646 = vunpack.c.l.bf16 %v1626
      %v1647 = vunpack.c.l.bf16 %v1627
      %v1648 = vunpack.c.l.bf16 %v1628
      %v1649 = vunpack.c.l.bf16 %v1629
      %v1650 = vunpack.c.l.bf16 %v1630
      %v1651 = vunpack.c.l.bf16 %v1631
      %v1652 = vunpack.c.l.bf16 %v1632
      %v1653 = vpack.c.bf16 %v1635, %v1633
      %v1654 = vpack.c.bf16 %v1639, %v1637
      %v1655 = vpack.c.bf16 %v1643, %v1641
      %v1656 = vpack.c.bf16 %v1647, %v1645
      %s1657 = scalar_lea.vmem %s3, 36
      %v1658 = vld [vmem:[%s1657] sm:$0x3]
      %v1660 = vsel %vm474, %v1653, 0
      %v1663 = vsel %vm474, %v1654, 0
      %v1666 = vsel %vm474, %v1655, 0
      %v1669 = vsel %vm474, %v1656, 0
      %v1672 = vsel %vm487, %v1658, 0
      %1674 = vmatpush.bf16.msra.mxu0 0
      %1675 = vmatpush.bf16.msra.mxu0 0
      %1676 = vmatpush.bf16.msra.mxu0 0
      %1677 = vmatpush.bf16.msra.mxu0 0
      %1678 = vmatpush.bf16.msra.mxu0 0
      %1679 = vmatpush.bf16.msra.mxu0 0
      %1680 = vmatpush.bf16.msra.mxu0 0
      %1681 = vmatpush.bf16.msra.mxu0 %v1672
      %1682 = vmatmul.bf16.gmra.mxu0 %v1660
      %v1683 = vpop.f32.mrf.mxu0
      %v1684 = vadd.f32 0.0, %v1683
      %v1685 = vpop.f32.mrf.mxu0
      %v1686 = vadd.f32 0.0, %v1685
      %1687 = vmatmul.bf16.gmra.mxu0 %v1663
      %v1688 = vpop.f32.mrf.mxu0
      %v1689 = vadd.f32 0.0, %v1688
      %v1690 = vpop.f32.mrf.mxu0
      %v1691 = vadd.f32 0.0, %v1690
      %1692 = vmatmul.bf16.gmra.mxu0 %v1666
      %v1693 = vpop.f32.mrf.mxu0
      %v1694 = vadd.f32 0.0, %v1693
      %v1695 = vpop.f32.mrf.mxu0
      %v1696 = vadd.f32 0.0, %v1695
      %1697 = vmatmul.bf16.gmra.mxu0 %v1669
      %v1698 = vpop.f32.mrf.mxu0
      %v1699 = vadd.f32 0.0, %v1698
      %v1700 = vpop.f32.mrf.mxu0
      %v1701 = vadd.f32 0.0, %v1700
      %1702 = vdwg.mxu0
      %v1703 = vadd.f32 %v1605, %v1684
      %v1704 = vadd.f32 %v1606, %v1686
      %v1705 = vadd.f32 %v1607, %v1689
      %v1706 = vadd.f32 %v1608, %v1691
      %v1707 = vadd.f32 %v1609, %v1694
      %v1708 = vadd.f32 %v1610, %v1696
      %v1709 = vadd.f32 %v1611, %v1699
      %v1710 = vadd.f32 %v1612, %v1701
      %v1727 = vrot.slane %v1633, 1
      %v1728 = vrot.slane %v1634, 1
      %v1729 = vsel %vm435, %v1727, %v1728
      %v1730 = vrot.slane %v1635, 1
      %v1731 = vrot.slane %v1636, 1
      %v1732 = vsel %vm435, %v1730, %v1731
      %v1733 = vrot.slane %v1637, 1
      %v1734 = vrot.slane %v1638, 1
      %v1735 = vsel %vm435, %v1733, %v1734
      %v1736 = vrot.slane %v1639, 1
      %v1737 = vrot.slane %v1640, 1
      %v1738 = vsel %vm435, %v1736, %v1737
      %v1739 = vrot.slane %v1641, 1
      %v1740 = vrot.slane %v1642, 1
      %v1741 = vsel %vm435, %v1739, %v1740
      %v1742 = vrot.slane %v1643, 1
      %v1743 = vrot.slane %v1644, 1
      %v1744 = vsel %vm435, %v1742, %v1743
      %v1745 = vrot.slane %v1645, 1
      %v1746 = vrot.slane %v1646, 1
      %v1747 = vsel %vm435, %v1745, %v1746
      %v1748 = vrot.slane %v1647, 1
      %v1749 = vrot.slane %v1648, 1
      %v1750 = vsel %vm435, %v1748, %v1749
      %v1759 = vpack.c.bf16 %v1732, %v1729
      %v1760 = vpack.c.bf16 %v1738, %v1735
      %v1761 = vpack.c.bf16 %v1744, %v1741
      %v1762 = vpack.c.bf16 %v1750, %v1747
      %s1763 = scalar_lea.vmem %s3, 38
      %v1764 = vld [vmem:[%s1763] sm:$0x3]
      %v1766 = vsel %vm474, %v1759, 0
      %v1769 = vsel %vm474, %v1760, 0
      %v1772 = vsel %vm474, %v1761, 0
      %v1775 = vsel %vm474, %v1762, 0
      %v1778 = vsel %vm487, %v1764, 0
      %1780 = vmatpush.bf16.msra.mxu0 0
      %1781 = vmatpush.bf16.msra.mxu0 0
      %1782 = vmatpush.bf16.msra.mxu0 0
      %1783 = vmatpush.bf16.msra.mxu0 0
      %1784 = vmatpush.bf16.msra.mxu0 0
      %1785 = vmatpush.bf16.msra.mxu0 0
      %1786 = vmatpush.bf16.msra.mxu0 0
      %1787 = vmatpush.bf16.msra.mxu0 %v1778
      %1788 = vmatmul.bf16.gmra.mxu0 %v1766
      %v1789 = vpop.f32.mrf.mxu0
      %v1790 = vadd.f32 0.0, %v1789
      %v1791 = vpop.f32.mrf.mxu0
      %v1792 = vadd.f32 0.0, %v1791
      %1793 = vmatmul.bf16.gmra.mxu0 %v1769
      %v1794 = vpop.f32.mrf.mxu0
      %v1795 = vadd.f32 0.0, %v1794
      %v1796 = vpop.f32.mrf.mxu0
      %v1797 = vadd.f32 0.0, %v1796
      %1798 = vmatmul.bf16.gmra.mxu0 %v1772
      %v1799 = vpop.f32.mrf.mxu0
      %v1800 = vadd.f32 0.0, %v1799
      %v1801 = vpop.f32.mrf.mxu0
      %v1802 = vadd.f32 0.0, %v1801
      %1803 = vmatmul.bf16.gmra.mxu0 %v1775
      %v1804 = vpop.f32.mrf.mxu0
      %v1805 = vadd.f32 0.0, %v1804
      %v1806 = vpop.f32.mrf.mxu0
      %v1807 = vadd.f32 0.0, %v1806
      %1808 = vdwg.mxu0
      %v1809 = vadd.f32 %v1703, %v1790
      %v1810 = vadd.f32 %v1704, %v1792
      %v1811 = vadd.f32 %v1705, %v1795
      %v1812 = vadd.f32 %v1706, %v1797
      %v1813 = vadd.f32 %v1707, %v1800
      %v1814 = vadd.f32 %v1708, %v1802
      %v1815 = vadd.f32 %v1709, %v1805
      %v1816 = vadd.f32 %v1710, %v1807
      %v1817 = vrot.slane %v1633, 2
      %v1818 = vrot.slane %v1634, 2
      %v1819 = vsel %vm564, %v1817, %v1818
      %v1820 = vrot.slane %v1635, 2
      %v1821 = vrot.slane %v1636, 2
      %v1822 = vsel %vm564, %v1820, %v1821
      %v1823 = vrot.slane %v1637, 2
      %v1824 = vrot.slane %v1638, 2
      %v1825 = vsel %vm564, %v1823, %v1824
      %v1826 = vrot.slane %v1639, 2
      %v1827 = vrot.slane %v1640, 2
      %v1828 = vsel %vm564, %v1826, %v1827
      %v1829 = vrot.slane %v1641, 2
      %v1830 = vrot.slane %v1642, 2
      %v1831 = vsel %vm564, %v1829, %v1830
      %v1832 = vrot.slane %v1643, 2
      %v1833 = vrot.slane %v1644, 2
      %v1834 = vsel %vm564, %v1832, %v1833
      %v1835 = vrot.slane %v1645, 2
      %v1836 = vrot.slane %v1646, 2
      %v1837 = vsel %vm564, %v1835, %v1836
      %v1838 = vrot.slane %v1647, 2
      %v1839 = vrot.slane %v1648, 2
      %v1840 = vsel %vm564, %v1838, %v1839
      %v1849 = vpack.c.bf16 %v1822, %v1819
      %v1850 = vpack.c.bf16 %v1828, %v1825
      %v1851 = vpack.c.bf16 %v1834, %v1831
      %v1852 = vpack.c.bf16 %v1840, %v1837
      %s1853 = scalar_lea.vmem %s3, 40
      %v1854 = vld [vmem:[%s1853] sm:$0x3]
      %v1856 = vsel %vm474, %v1849, 0
      %v1859 = vsel %vm474, %v1850, 0
      %v1862 = vsel %vm474, %v1851, 0
      %v1865 = vsel %vm474, %v1852, 0
      %v1868 = vsel %vm487, %v1854, 0
      %1870 = vmatpush.bf16.msra.mxu0 0
      %1871 = vmatpush.bf16.msra.mxu0 0
      %1872 = vmatpush.bf16.msra.mxu0 0
      %1873 = vmatpush.bf16.msra.mxu0 0
      %1874 = vmatpush.bf16.msra.mxu0 0
      %1875 = vmatpush.bf16.msra.mxu0 0
      %1876 = vmatpush.bf16.msra.mxu0 0
      %1877 = vmatpush.bf16.msra.mxu0 %v1868
      %1878 = vmatmul.bf16.gmra.mxu0 %v1856
      %v1879 = vpop.f32.mrf.mxu0
      %v1880 = vadd.f32 0.0, %v1879
      %v1881 = vpop.f32.mrf.mxu0
      %v1882 = vadd.f32 0.0, %v1881
      %1883 = vmatmul.bf16.gmra.mxu0 %v1859
      %v1884 = vpop.f32.mrf.mxu0
      %v1885 = vadd.f32 0.0, %v1884
      %v1886 = vpop.f32.mrf.mxu0
      %v1887 = vadd.f32 0.0, %v1886
      %1888 = vmatmul.bf16.gmra.mxu0 %v1862
      %v1889 = vpop.f32.mrf.mxu0
      %v1890 = vadd.f32 0.0, %v1889
      %v1891 = vpop.f32.mrf.mxu0
      %v1892 = vadd.f32 0.0, %v1891
      %1893 = vmatmul.bf16.gmra.mxu0 %v1865
      %v1894 = vpop.f32.mrf.mxu0
      %v1895 = vadd.f32 0.0, %v1894
      %v1896 = vpop.f32.mrf.mxu0
      %v1897 = vadd.f32 0.0, %v1896
      %1898 = vdwg.mxu0
      %v1899 = vadd.f32 %v1809, %v1880
      %v1900 = vadd.f32 %v1810, %v1882
      %v1901 = vadd.f32 %v1811, %v1885
      %v1902 = vadd.f32 %v1812, %v1887
      %v1903 = vadd.f32 %v1813, %v1890
      %v1904 = vadd.f32 %v1814, %v1892
      %v1905 = vadd.f32 %v1815, %v1895
      %v1906 = vadd.f32 %v1816, %v1897
      %v1907 = vpack.c.bf16 %v1637, %v1635
      %v1908 = vpack.c.bf16 %v1641, %v1639
      %v1909 = vpack.c.bf16 %v1645, %v1643
      %v1910 = vpack.c.bf16 %v1649, %v1647
      %s1911 = scalar_lea.vmem %s3, 42
      %v1912 = vld [vmem:[%s1911] sm:$0x3]
      %v1914 = vsel %vm474, %v1907, 0
      %v1917 = vsel %vm474, %v1908, 0
      %v1920 = vsel %vm474, %v1909, 0
      %v1923 = vsel %vm474, %v1910, 0
      %v1926 = vsel %vm487, %v1912, 0
      %1928 = vmatpush.bf16.msra.mxu0 0
      %1929 = vmatpush.bf16.msra.mxu0 0
      %1930 = vmatpush.bf16.msra.mxu0 0
      %1931 = vmatpush.bf16.msra.mxu0 0
      %1932 = vmatpush.bf16.msra.mxu0 0
      %1933 = vmatpush.bf16.msra.mxu0 0
      %1934 = vmatpush.bf16.msra.mxu0 0
      %1935 = vmatpush.bf16.msra.mxu0 %v1926
      %1936 = vmatmul.bf16.gmra.mxu0 %v1914
      %v1937 = vpop.f32.mrf.mxu0
      %v1938 = vadd.f32 0.0, %v1937
      %v1939 = vpop.f32.mrf.mxu0
      %v1940 = vadd.f32 0.0, %v1939
      %1941 = vmatmul.bf16.gmra.mxu0 %v1917
      %v1942 = vpop.f32.mrf.mxu0
      %v1943 = vadd.f32 0.0, %v1942
      %v1944 = vpop.f32.mrf.mxu0
      %v1945 = vadd.f32 0.0, %v1944
      %1946 = vmatmul.bf16.gmra.mxu0 %v1920
      %v1947 = vpop.f32.mrf.mxu0
      %v1948 = vadd.f32 0.0, %v1947
      %v1949 = vpop.f32.mrf.mxu0
      %v1950 = vadd.f32 0.0, %v1949
      %1951 = vmatmul.bf16.gmra.mxu0 %v1923
      %v1952 = vpop.f32.mrf.mxu0
      %v1953 = vadd.f32 0.0, %v1952
      %v1954 = vpop.f32.mrf.mxu0
      %v1955 = vadd.f32 0.0, %v1954
      %1956 = vdwg.mxu0
      %v1957 = vadd.f32 %v1899, %v1938
      %v1958 = vadd.f32 %v1900, %v1940
      %v1959 = vadd.f32 %v1901, %v1943
      %v1960 = vadd.f32 %v1902, %v1945
      %v1961 = vadd.f32 %v1903, %v1948
      %v1962 = vadd.f32 %v1904, %v1950
      %v1963 = vadd.f32 %v1905, %v1953
      %v1964 = vadd.f32 %v1906, %v1955
      %v1967 = vrot.slane %v1649, 1
      %v1968 = vrot.slane %v1650, 1
      %v1969 = vsel %vm435, %v1967, %v1968
      %v1971 = vpack.c.bf16 %v1735, %v1732
      %v1972 = vpack.c.bf16 %v1741, %v1738
      %v1973 = vpack.c.bf16 %v1747, %v1744
      %v1974 = vpack.c.bf16 %v1969, %v1750
      %s1975 = scalar_lea.vmem %s3, 44
      %v1976 = vld [vmem:[%s1975] sm:$0x3]
      %v1978 = vsel %vm474, %v1971, 0
      %v1981 = vsel %vm474, %v1972, 0
      %v1984 = vsel %vm474, %v1973, 0
      %v1987 = vsel %vm474, %v1974, 0
      %v1990 = vsel %vm487, %v1976, 0
      %1992 = vmatpush.bf16.msra.mxu0 0
      %1993 = vmatpush.bf16.msra.mxu0 0
      %1994 = vmatpush.bf16.msra.mxu0 0
      %1995 = vmatpush.bf16.msra.mxu0 0
      %1996 = vmatpush.bf16.msra.mxu0 0
      %1997 = vmatpush.bf16.msra.mxu0 0
      %1998 = vmatpush.bf16.msra.mxu0 0
      %1999 = vmatpush.bf16.msra.mxu0 %v1990
      %2000 = vmatmul.bf16.gmra.mxu0 %v1978
      %v2001 = vpop.f32.mrf.mxu0
      %v2002 = vadd.f32 0.0, %v2001
      %v2003 = vpop.f32.mrf.mxu0
      %v2004 = vadd.f32 0.0, %v2003
      %2005 = vmatmul.bf16.gmra.mxu0 %v1981
      %v2006 = vpop.f32.mrf.mxu0
      %v2007 = vadd.f32 0.0, %v2006
      %v2008 = vpop.f32.mrf.mxu0
      %v2009 = vadd.f32 0.0, %v2008
      %2010 = vmatmul.bf16.gmra.mxu0 %v1984
      %v2011 = vpop.f32.mrf.mxu0
      %v2012 = vadd.f32 0.0, %v2011
      %v2013 = vpop.f32.mrf.mxu0
      %v2014 = vadd.f32 0.0, %v2013
      %2015 = vmatmul.bf16.gmra.mxu0 %v1987
      %v2016 = vpop.f32.mrf.mxu0
      %v2017 = vadd.f32 0.0, %v2016
      %v2018 = vpop.f32.mrf.mxu0
      %v2019 = vadd.f32 0.0, %v2018
      %2020 = vdwg.mxu0
      %v2021 = vadd.f32 %v1957, %v2002
      %v2022 = vadd.f32 %v1958, %v2004
      %v2023 = vadd.f32 %v1959, %v2007
      %v2024 = vadd.f32 %v1960, %v2009
      %v2025 = vadd.f32 %v1961, %v2012
      %v2026 = vadd.f32 %v1962, %v2014
      %v2027 = vadd.f32 %v1963, %v2017
      %v2028 = vadd.f32 %v1964, %v2019
      %v2029 = vrot.slane %v1649, 2
      %v2030 = vrot.slane %v1650, 2
      %v2031 = vsel %vm564, %v2029, %v2030
      %v2033 = vpack.c.bf16 %v1825, %v1822
      %v2034 = vpack.c.bf16 %v1831, %v1828
      %v2035 = vpack.c.bf16 %v1837, %v1834
      %v2036 = vpack.c.bf16 %v2031, %v1840
      %s2037 = scalar_lea.vmem %s3, 46
      %v2038 = vld [vmem:[%s2037] sm:$0x3]
      %v2040 = vsel %vm474, %v2033, 0
      %v2043 = vsel %vm474, %v2034, 0
      %v2046 = vsel %vm474, %v2035, 0
      %v2049 = vsel %vm474, %v2036, 0
      %v2052 = vsel %vm487, %v2038, 0
      %2054 = vmatpush.bf16.msra.mxu0 0
      %2055 = vmatpush.bf16.msra.mxu0 0
      %2056 = vmatpush.bf16.msra.mxu0 0
      %2057 = vmatpush.bf16.msra.mxu0 0
      %2058 = vmatpush.bf16.msra.mxu0 0
      %2059 = vmatpush.bf16.msra.mxu0 0
      %2060 = vmatpush.bf16.msra.mxu0 0
      %2061 = vmatpush.bf16.msra.mxu0 %v2052
      %2062 = vmatmul.bf16.gmra.mxu0 %v2040
      %v2063 = vpop.f32.mrf.mxu0
      %v2064 = vadd.f32 0.0, %v2063
      %v2065 = vpop.f32.mrf.mxu0
      %v2066 = vadd.f32 0.0, %v2065
      %2067 = vmatmul.bf16.gmra.mxu0 %v2043
      %v2068 = vpop.f32.mrf.mxu0
      %v2069 = vadd.f32 0.0, %v2068
      %v2070 = vpop.f32.mrf.mxu0
      %v2071 = vadd.f32 0.0, %v2070
      %2072 = vmatmul.bf16.gmra.mxu0 %v2046
      %v2073 = vpop.f32.mrf.mxu0
      %v2074 = vadd.f32 0.0, %v2073
      %v2075 = vpop.f32.mrf.mxu0
      %v2076 = vadd.f32 0.0, %v2075
      %2077 = vmatmul.bf16.gmra.mxu0 %v2049
      %v2078 = vpop.f32.mrf.mxu0
      %v2079 = vadd.f32 0.0, %v2078
      %v2080 = vpop.f32.mrf.mxu0
      %v2081 = vadd.f32 0.0, %v2080
      %2082 = vdwg.mxu0
      %v2083 = vadd.f32 %v2021, %v2064
      %v2084 = vadd.f32 %v2022, %v2066
      %v2085 = vadd.f32 %v2023, %v2069
      %v2086 = vadd.f32 %v2024, %v2071
      %v2087 = vadd.f32 %v2025, %v2074
      %v2088 = vadd.f32 %v2026, %v2076
      %v2089 = vadd.f32 %v2027, %v2079
      %v2090 = vadd.f32 %v2028, %v2081
      %v2091 = vpack.c.bf16 %v1651, %v1649
      %s2092 = scalar_lea.vmem %s3, 48
      %v2093 = vld [vmem:[%s2092] sm:$0x3]
      %v2095 = vsel %vm474, %v2091, 0
      %v2098 = vsel %vm487, %v2093, 0
      %2100 = vmatpush.bf16.msra.mxu0 0
      %2101 = vmatpush.bf16.msra.mxu0 0
      %2102 = vmatpush.bf16.msra.mxu0 0
      %2103 = vmatpush.bf16.msra.mxu0 0
      %2104 = vmatpush.bf16.msra.mxu0 0
      %2105 = vmatpush.bf16.msra.mxu0 0
      %2106 = vmatpush.bf16.msra.mxu0 0
      %2107 = vmatpush.bf16.msra.mxu0 %v2098
      %2108 = vmatmul.bf16.gmra.mxu0 %v1663
      %v2109 = vpop.f32.mrf.mxu0
      %v2110 = vadd.f32 0.0, %v2109
      %v2111 = vpop.f32.mrf.mxu0
      %v2112 = vadd.f32 0.0, %v2111
      %2113 = vmatmul.bf16.gmra.mxu0 %v1666
      %v2114 = vpop.f32.mrf.mxu0
      %v2115 = vadd.f32 0.0, %v2114
      %v2116 = vpop.f32.mrf.mxu0
      %v2117 = vadd.f32 0.0, %v2116
      %2118 = vmatmul.bf16.gmra.mxu0 %v1669
      %v2119 = vpop.f32.mrf.mxu0
      %v2120 = vadd.f32 0.0, %v2119
      %v2121 = vpop.f32.mrf.mxu0
      %v2122 = vadd.f32 0.0, %v2121
      %2123 = vmatmul.bf16.gmra.mxu0 %v2095
      %v2124 = vpop.f32.mrf.mxu0
      %v2125 = vadd.f32 0.0, %v2124
      %v2126 = vpop.f32.mrf.mxu0
      %v2127 = vadd.f32 0.0, %v2126
      %2128 = vdwg.mxu0
      %v2129 = vadd.f32 %v2083, %v2110
      %v2130 = vadd.f32 %v2084, %v2112
      %v2131 = vadd.f32 %v2085, %v2115
      %v2132 = vadd.f32 %v2086, %v2117
      %v2133 = vadd.f32 %v2087, %v2120
      %v2134 = vadd.f32 %v2088, %v2122
      %v2135 = vadd.f32 %v2089, %v2125
      %v2136 = vadd.f32 %v2090, %v2127
      %v2139 = vrot.slane %v1651, 1
      %v2140 = vrot.slane %v1652, 1
      %v2141 = vsel %vm435, %v2139, %v2140
      %v2143 = vpack.c.bf16 %v2141, %v1969
      %s2144 = scalar_lea.vmem %s3, 50
      %v2145 = vld [vmem:[%s2144] sm:$0x3]
      %v2147 = vsel %vm474, %v2143, 0
      %v2150 = vsel %vm487, %v2145, 0
      %2152 = vmatpush.bf16.msra.mxu0 0
      %2153 = vmatpush.bf16.msra.mxu0 0
      %2154 = vmatpush.bf16.msra.mxu0 0
      %2155 = vmatpush.bf16.msra.mxu0 0
      %2156 = vmatpush.bf16.msra.mxu0 0
      %2157 = vmatpush.bf16.msra.mxu0 0
      %2158 = vmatpush.bf16.msra.mxu0 0
      %2159 = vmatpush.bf16.msra.mxu0 %v2150
      %2160 = vmatmul.bf16.gmra.mxu0 %v1769
      %v2161 = vpop.f32.mrf.mxu0
      %v2162 = vadd.f32 0.0, %v2161
      %v2163 = vpop.f32.mrf.mxu0
      %v2164 = vadd.f32 0.0, %v2163
      %2165 = vmatmul.bf16.gmra.mxu0 %v1772
      %v2166 = vpop.f32.mrf.mxu0
      %v2167 = vadd.f32 0.0, %v2166
      %v2168 = vpop.f32.mrf.mxu0
      %v2169 = vadd.f32 0.0, %v2168
      %2170 = vmatmul.bf16.gmra.mxu0 %v1775
      %v2171 = vpop.f32.mrf.mxu0
      %v2172 = vadd.f32 0.0, %v2171
      %v2173 = vpop.f32.mrf.mxu0
      %v2174 = vadd.f32 0.0, %v2173
      %2175 = vmatmul.bf16.gmra.mxu0 %v2147
      %v2176 = vpop.f32.mrf.mxu0
      %v2177 = vadd.f32 0.0, %v2176
      %v2178 = vpop.f32.mrf.mxu0
      %v2179 = vadd.f32 0.0, %v2178
      %2180 = vdwg.mxu0
      %v2181 = vadd.f32 %v2129, %v2162
      %v2182 = vadd.f32 %v2130, %v2164
      %v2183 = vadd.f32 %v2131, %v2167
      %v2184 = vadd.f32 %v2132, %v2169
      %v2185 = vadd.f32 %v2133, %v2172
      %v2186 = vadd.f32 %v2134, %v2174
      %v2187 = vadd.f32 %v2135, %v2177
      %v2188 = vadd.f32 %v2136, %v2179
      %v2189 = vrot.slane %v1651, 2
      %v2190 = vrot.slane %v1652, 2
      %v2191 = vsel %vm564, %v2189, %v2190
      %v2193 = vpack.c.bf16 %v2191, %v2031
      %s2194 = scalar_lea.vmem %s3, 52
      %v2195 = vld [vmem:[%s2194] sm:$0x3]
      %v2197 = vsel %vm474, %v2193, 0
      %v2200 = vsel %vm487, %v2195, 0
      %2202 = vmatpush.bf16.msra.mxu0 0
      %2203 = vmatpush.bf16.msra.mxu0 0
      %2204 = vmatpush.bf16.msra.mxu0 0
      %2205 = vmatpush.bf16.msra.mxu0 0
      %2206 = vmatpush.bf16.msra.mxu0 0
      %2207 = vmatpush.bf16.msra.mxu0 0
      %2208 = vmatpush.bf16.msra.mxu0 0
      %2209 = vmatpush.bf16.msra.mxu0 %v2200
      %2210 = vmatmul.bf16.gmra.mxu0 %v1859
      %v2211 = vpop.f32.mrf.mxu0
      %v2212 = vadd.f32 0.0, %v2211
      %v2213 = vpop.f32.mrf.mxu0
      %v2214 = vadd.f32 0.0, %v2213
      %2215 = vmatmul.bf16.gmra.mxu0 %v1862
      %v2216 = vpop.f32.mrf.mxu0
      %v2217 = vadd.f32 0.0, %v2216
      %v2218 = vpop.f32.mrf.mxu0
      %v2219 = vadd.f32 0.0, %v2218
      %2220 = vmatmul.bf16.gmra.mxu0 %v1865
      %v2221 = vpop.f32.mrf.mxu0
      %v2222 = vadd.f32 0.0, %v2221
      %v2223 = vpop.f32.mrf.mxu0
      %v2224 = vadd.f32 0.0, %v2223
      %2225 = vmatmul.bf16.gmra.mxu0 %v2197
      %v2226 = vpop.f32.mrf.mxu0
      %v2227 = vadd.f32 0.0, %v2226
      %v2228 = vpop.f32.mrf.mxu0
      %v2229 = vadd.f32 0.0, %v2228
      %2230 = vdwg.mxu0
      %v2231 = vadd.f32 %v2181, %v2212
      %v2232 = vadd.f32 %v2182, %v2214
      %v2233 = vadd.f32 %v2183, %v2217
      %v2234 = vadd.f32 %v2184, %v2219
      %v2235 = vadd.f32 %v2185, %v2222
      %v2236 = vadd.f32 %v2186, %v2224
      %v2237 = vadd.f32 %v2187, %v2227
      %v2238 = vadd.f32 %v2188, %v2229
      %2239 = vst [vmem:[%s364] sm:$0xff] %v2231
      %2240 = vst [vmem:[%s364 + $0x8] sm:$0xff] %v2232
      %2241 = vst [vmem:[%s364 + $0x10] sm:$0xff] %v2233
      %2242 = vst [vmem:[%s364 + $0x18] sm:$0xff] %v2234
      %2243 = vst [vmem:[%s364 + $0x20] sm:$0xff] %v2235
      %2244 = vst [vmem:[%s364 + $0x28] sm:$0xff] %v2236
      %2245 = vst [vmem:[%s364 + $0x30] sm:$0xff] %v2237
      %2246 = vst [vmem:[%s364 + $0x38] sm:$0xff] %v2238
      %v2247 = vld [vmem:[%s5] sm:$0x1]
      %v2248 = vadd.f32 %v2231, %v2232
      %v2249 = vadd.f32 %v2248, %v2233
      %v2250 = vadd.f32 %v2249, %v2234
      %v2251 = vadd.f32 %v2250, %v2235
      %v2252 = vadd.f32 %v2251, %v2236
      %v2253 = vadd.f32 %v2252, %v2237
      %v2254 = vadd.f32 %v2253, %v2238
      %v2255 = vrot.slane %v2254, 4
      %v2256 = vadd.f32 %v2254, %v2255
      %v2257 = vrot.slane %v2256, 2
      %v2258 = vadd.f32 %v2256, %v2257
      %v2259 = vrot.slane %v2258, 1
      %v2260 = vadd.f32 %v2258, %v2259
      %v2261 = vadd.f32 %v2247, %v2260
      %2262 = vst [vmem:[%s5] sm:$0x1] %v2261
      %v2263 = vld [vmem:[%s6] sm:$0x1]
      %v2264 = vmul.f32 %v2231, %v2231
      %v2265 = vmul.f32 %v2232, %v2232
      %v2266 = vmul.f32 %v2233, %v2233
      %v2267 = vmul.f32 %v2234, %v2234
      %v2268 = vmul.f32 %v2235, %v2235
      %v2269 = vmul.f32 %v2236, %v2236
      %v2270 = vmul.f32 %v2237, %v2237
      %v2271 = vmul.f32 %v2238, %v2238
      %v2272 = vadd.f32 %v2264, %v2265
      %v2273 = vadd.f32 %v2272, %v2266
      %v2274 = vadd.f32 %v2273, %v2267
      %v2275 = vadd.f32 %v2274, %v2268
      %v2276 = vadd.f32 %v2275, %v2269
      %v2277 = vadd.f32 %v2276, %v2270
      %v2278 = vadd.f32 %v2277, %v2271
      %v2279 = vrot.slane %v2278, 4
      %v2280 = vadd.f32 %v2278, %v2279
      %v2281 = vrot.slane %v2280, 2
      %v2282 = vadd.f32 %v2280, %v2281
      %v2283 = vrot.slane %v2282, 1
      %v2284 = vadd.f32 %v2282, %v2283
      %v2285 = vadd.f32 %v2263, %v2284
      %2286 = vst [vmem:[%s6] sm:$0x1] %v2285
      %p2287 = scmp.lt.s32.totalorder %s22, 1
      %s2288 = scalar_select %p2287, %s22, 1
      %p2289 = scmp.lt.s32.totalorder %s23, 7
      %s2290 = scalar_select %p2289, %s23, 7
      %s2291 = smul.addr %s2290, 8
      %s2292 = smul.addr %s2288, 64
      %s2293 = sadd.s32 %s2291, %s2292
      %s2294 = smul.addr %s2293, 8
      %s2295 = scalar_lea.vmem %s4, %s2294
      // Predicated region
      $region41: #{conv_bn_relu_3d.2} parent=35 // pred_check
        %p2296 = pneg %p159
      $region42: #{conv_bn_relu_3d.2} parent=35 // pred_check_branch
        %2298 = sbr.rel (%p2296) target = $region44
      $region43: #{conv_bn_relu_3d.2} parent=35 // pred_region
        _
      $region44: #{conv_bn_relu_3d.2} parent=35 // pred_fallthru
        _
      // Predicated region
      $region45: #{conv_bn_relu_3d.2} parent=35 // pred_check
        %p2299 = pneg %p180
      $region46: #{conv_bn_relu_3d.2} parent=35 // pred_check_branch
        %2301 = sbr.rel (%p2299) target = $region48
      $region47: #{conv_bn_relu_3d.2} parent=35 // pred_region
        _
      $region48: #{conv_bn_relu_3d.2} parent=35 // pred_fallthru
        _
      // Predicated region
      $region49: #{conv_bn_relu_3d.2} parent=35 // pred_check
        %p2302 = pneg %p201
      $region50: #{conv_bn_relu_3d.2} parent=35 // pred_check_branch
        %2304 = sbr.rel (%p2302) target = $region52
      $region51: #{conv_bn_relu_3d.2} parent=35 // pred_region
        _
      $region52: #{conv_bn_relu_3d.2} parent=35 // pred_fallthru
        _
      // Predicated region
      $region53: #{conv_bn_relu_3d.2} parent=35 // pred_check
        %p2305 = pneg %p180
      $region54: #{conv_bn_relu_3d.2} parent=35 // pred_check_branch
        %2307 = sbr.rel (%p2305) target = $region56
      $region55: #{conv_bn_relu_3d.2} parent=35 // pred_region
        _
      $region56: #{conv_bn_relu_3d.2} parent=35 // pred_fallthru
        _
      // Predicated region
      $region57: #{conv_bn_relu_3d.2} parent=35 // pred_check
        %p2308 = pneg %p201
      $region58: #{conv_bn_relu_3d.2} parent=35 // pred_check_branch
        %2310 = sbr.rel (%p2308) target = $region60
      $region59: #{conv_bn_relu_3d.2} parent=35 // pred_region
        _
      $region60: #{conv_bn_relu_3d.2} parent=35 // pred_fallthru
        _
    $region36: #{conv_bn_relu_3d.2} parent=5 // pred_fallthru
      _
    %p2311 = scmp.le.s32.totalorder 2, %s13
    // Predicated region
    $region61: #{conv_bn_relu_3d.2} parent=5 // pred_check
      %p2312 = pneg %p2311
    $region62: #{conv_bn_relu_3d.2} parent=5 // pred_check_branch
      %2314 = sbr.rel (%p2312) target = $region64
    $region63: #{conv_bn_relu_3d.2} parent=5 // pred_region
      %s2315 = ssub.s32 %s13, 2
      // Predicated region
      $region65: #{conv_bn_relu_3d.2} parent=63 // pred_check
        %p2316 = pneg %p165
      $region66: #{conv_bn_relu_3d.2} parent=63 // pred_check_branch
        %2318 = sbr.rel (%p2316) target = $region68
      $region67: #{conv_bn_relu_3d.2} parent=63 // pred_region
        %p2319 = scmp.lt.s32.totalorder %s24, 1
        %s2320 = scalar_select %p2319, %s24, 1
        %p2321 = scmp.lt.s32.totalorder %s25, 7
        %s2322 = scalar_select %p2321, %s25, 7
        %s2323 = smul.addr %s2322, 8
        %s2324 = smul.addr %s2320, 64
        %s2325 = sadd.s32 %s2323, %s2324
        %s2326 = smul.addr %s2325, 8
        %s2327 = scalar_lea.vmem %s4, %s2326
      $region68: #{conv_bn_relu_3d.2} parent=63 // pred_fallthru
        _
    $region64: #{conv_bn_relu_3d.2} parent=5 // pred_fallthru
      _
  $region6: #{conv_bn_relu_3d.2} parent=0 // loop_footer
    %s17 = sadd.s32 1, %s13
  $region7: #{conv_bn_relu_3d.2} parent=0 // loop_footer_branch
    %12 = sbr.rel target = $region3
  $region8: #{conv_bn_relu_3d.2} parent=0 // loop_exit
    _

</llo_original>
